<compile_context>
chip_gen: v5e
topology: v5e:2x2
jax: 0.10.0
libtpu: 0.0.40
codegen_flags: <defaults>
</compile_context>

<pallas_src>
import functools

import jax
import jax.numpy as jnp
from jax.experimental import pallas as pl
from jax.experimental.pallas import tpu as pltpu


def _layernorm(x, gamma, beta, eps=1e-5):
    # PyTorch nn.LayerNorm: biased variance, eps inside rsqrt. Kept in f32.
    mu = jnp.mean(x, axis=-1, keepdims=True)
    var = jnp.mean((x - mu) ** 2, axis=-1, keepdims=True)
    return (x - mu) * jax.lax.rsqrt(var + eps) * gamma + beta


def block_kernel(x_ref, ln1g_ref, ln1b_ref, wqkv_ref, wp_ref, bp_ref,
                 ln2g_ref, ln2b_ref, w1_ref, b1_ref, w2_ref, b2_ref, o_ref,
                 *, n_head, head_size):
    # One grid step == one batch element; the whole (T, C) tile lives in VMEM.
    x = x_ref[0]                                   # (T, C) f32
    T, C = x.shape
    hs = head_size

    # ---- LayerNorm 1 (f32) ----
    ln1 = _layernorm(x, ln1g_ref[0], ln1b_ref[0])

    # ---- Multi-head causal self-attention (head-batched, bf16 matmul operands) ----
    # Fused QKV: one batched einsum over contiguous per-head weights (n_head, C, 3*hs).
    ln1_h = jnp.broadcast_to(ln1.astype(jnp.bfloat16)[None, :, :], (n_head, T, C))
    qkv = jnp.einsum('htc,hcd->htd', ln1_h, wqkv_ref[...],
                     preferred_element_type=jnp.float32)      # (n_head, T, 3*hs) f32
    q = qkv[:, :, 0 * hs:1 * hs]
    k = qkv[:, :, 1 * hs:2 * hs]
    v = qkv[:, :, 2 * hs:3 * hs]

    # Additive causal bias (0 on/below diagonal, -1e30 above); one select total,
    # one add per score element (instead of a select per score element).
    row = jax.lax.broadcasted_iota(jnp.int32, (T, T), 0)
    col = jax.lax.broadcasted_iota(jnp.int32, (T, T), 1)
    bias = jnp.where(row >= col, 0.0, -1e30)                  # (T, T) f32

    scale = C ** (-0.5)   # NOTE: module scales by n_embed**-0.5 (not head_size**-0.5)

    # Scores: batched, contracting the head dim directly (no k.T / no XLU transpose).
    scores = jnp.einsum('htd,hsd->hts',
                        q.astype(jnp.bfloat16), k.astype(jnp.bfloat16),
                        preferred_element_type=jnp.float32) * scale
    scores = scores + bias                                    # broadcast over heads

    # Single stable softmax over all heads; divide replaced by EUP approx reciprocal.
    m = jnp.max(scores, axis=-1, keepdims=True)
    e = jnp.exp(scores - m)
    denom = jnp.sum(e, axis=-1, keepdims=True)
    p = e * pl.reciprocal(denom, approx=True)                 # (n_head, T, T) f32
    # attention dropout: identity (eval mode)

    ctx = jnp.einsum('hts,hsd->htd',
                     p.astype(jnp.bfloat16), v.astype(jnp.bfloat16),
                     preferred_element_type=jnp.float32)      # (n_head, T, hs) f32

    # Output projection folded over heads: no concatenate, no transpose.
    proj = jnp.einsum('htd,hdc->htc',
                      ctx.astype(jnp.bfloat16), wp_ref[...],
                      preferred_element_type=jnp.float32)     # (n_head, T, C) f32
    sa = jnp.sum(proj, axis=0) + bp_ref[0]                    # (T, C)
    # proj dropout: identity (eval mode)

    x1 = x + sa

    # ---- LayerNorm 2 + FeedForward ----
    ln2 = _layernorm(x1, ln2g_ref[0], ln2b_ref[0])
    h1 = jnp.dot(ln2.astype(jnp.bfloat16), w1_ref[...],
                 preferred_element_type=jnp.float32) + b1_ref[0]
    h1 = jnp.maximum(h1, 0.0)                                  # ReLU
    ff = jnp.dot(h1.astype(jnp.bfloat16), w2_ref[...],
                 preferred_element_type=jnp.float32) + b2_ref[0]
    # ffwd dropout: identity (eval mode)

    o_ref[0] = x1 + ff


def block_forward(x, params, n_head):
    B, T, C = x.shape
    hs = C // n_head
    H = 4 * C

    # ---- wrapper-side weight packing (free; keeps all relayout out of the kernel) ----
    # Per-head contiguous QKV weights: (n_head, C, 3*hs), bf16.
    wq = params["wq"].reshape(C, n_head, hs)
    wk = params["wk"].reshape(C, n_head, hs)
    wv = params["wv"].reshape(C, n_head, hs)
    w_qkv = jnp.concatenate([wq, wk, wv], axis=-1)             # (C, n_head, 3*hs)
    w_qkv = jnp.transpose(w_qkv, (1, 0, 2)).astype(jnp.bfloat16)   # (n_head, C, 3*hs)
    # Per-head output-projection weights: (n_head, hs, C), bf16.
    wp_h = params["wp"].reshape(n_head, hs, C).astype(jnp.bfloat16)
    w1 = params["w1"].astype(jnp.bfloat16)
    w2 = params["w2"].astype(jnp.bfloat16)

    kernel = functools.partial(block_kernel, n_head=n_head, head_size=hs)

    def rep(shape):
        # Parameter blocks: same full block at every grid step.
        n = len(shape)
        return pl.BlockSpec(shape, lambda b, n=n: (0,) * n)

    in_specs = [
        pl.BlockSpec((1, T, C), lambda b: (b, 0, 0)),  # x
        rep((1, C)), rep((1, C)),                      # ln1 gamma, beta
        rep((n_head, C, 3 * hs)),                      # fused per-head QKV weights
        rep((n_head, hs, C)),                          # per-head projection weights
        rep((1, C)),                                   # proj bias
        rep((1, C)), rep((1, C)),                      # ln2 gamma, beta
        rep((C, H)), rep((1, H)),                      # W1, b1
        rep((H, C)), rep((1, C)),                      # W2, b2
    ]
    out_specs = pl.BlockSpec((1, T, C), lambda b: (b, 0, 0))

    fn = pl.pallas_call(
        kernel,
        out_shape=jax.ShapeDtypeStruct((B, T, C), jnp.float32),
        grid_spec=pltpu.PrefetchScalarGridSpec(
            num_scalar_prefetch=0,
            grid=(B,),
            in_specs=in_specs,
            out_specs=out_specs,
        ),
        compiler_params=pltpu.CompilerParams(
            dimension_semantics=("parallel",)),
    )
    return fn(x,
              params["ln1_g"], params["ln1_b"],
              w_qkv, wp_h, params["bp"],
              params["ln2_g"], params["ln2_b"],
              w1, params["b1"],
              w2, params["b2"])


def block_reference(x, params, n_head):
    """Pure-JAX f32 reference mirroring the PyTorch module (eval mode)."""
    B, T, C = x.shape
    head_size = C // n_head

    def ln(v, g, b):
        mu = jnp.mean(v, axis=-1, keepdims=True)
        var = jnp.mean((v - mu) ** 2, axis=-1, keepdims=True)
        return (v - mu) / jnp.sqrt(var + 1e-5) * g[0] + b[0]

    ln1 = ln(x, params["ln1_g"], params["ln1_b"])
    mask = jnp.tril(jnp.ones((T, T), dtype=bool))
    outs = []
    for h in range(n_head):
        sl = slice(h * head_size, (h + 1) * head_size)
        k = ln1 @ params["wk"][:, sl]
        q = ln1 @ params["wq"][:, sl]
        v = ln1 @ params["wv"][:, sl]
        wei = q @ jnp.swapaxes(k, -1, -2) * (C ** -0.5)
        wei = jnp.where(mask, wei, -jnp.inf)
        wei = jax.nn.softmax(wei, axis=-1)
        outs.append(wei @ v)
    sa = jnp.concatenate(outs, axis=-1) @ params["wp"] + params["bp"][0]
    x1 = x + sa
    ln2 = ln(x1, params["ln2_g"], params["ln2_b"])
    ff = jnp.maximum(ln2 @ params["w1"] + params["b1"][0], 0.0) @ params["w2"] + params["b2"][0]
    return x1 + ff


if __name__ == "__main__":
    # Small shapes consistent with the module: head_size = n_embed // n_head
    B, T = 2, 8
    n_head = 6
    n_embed = 48          # head_size = 8
    H = 4 * n_embed

    key = jax.random.PRNGKey(0)
    ks = jax.random.split(key, 10)

    def w(k, shape, scale):
        return jax.random.normal(k, shape, dtype=jnp.float32) * scale

    params = {
        "ln1_g": jnp.ones((1, n_embed), jnp.float32),
        "ln1_b": jnp.zeros((1, n_embed), jnp.float32),
        "wk": w(ks[0], (n_embed, n_embed), 0.05),
        "wq": w(ks[1], (n_embed, n_embed), 0.05),
        "wv": w(ks[2], (n_embed, n_embed), 0.05),
        "wp": w(ks[3], (n_embed, n_embed), 0.05),
        "bp": w(ks[4], (1, n_embed), 0.01),
        "ln2_g": jnp.ones((1, n_embed), jnp.float32),
        "ln2_b": jnp.zeros((1, n_embed), jnp.float32),
        "w1": w(ks[5], (n_embed, H), 0.05),
        "b1": w(ks[6], (1, H), 0.01),
        "w2": w(ks[7], (H, n_embed), 0.05),
        "b2": w(ks[8], (1, n_embed), 0.01),
    }

    x = jax.random.normal(ks[9], (B, T, n_embed), dtype=jnp.float32)

    out = block_forward(x, params, n_head)
    out = jax.block_until_ready(out)

    ref = block_reference(x, params, n_head)
    assert out.shape == (B, T, n_embed)
    # bf16 matmul operands + approx-reciprocal softmax vs. a pure-f32 reference:
    # expected deviation is a few e-3 at these magnitudes; 2e-2 still catches any
    # layout / packing / semantics bug by orders of magnitude.
    err = float(jnp.max(jnp.abs(out - ref)))
    assert jnp.allclose(out, ref, atol=2e-2, rtol=2e-2), err

    print("KERNEL_OK")
</pallas_src>

<mosaic_0001>
module attributes {stable_mosaic.version = 11 : i64} {
  func.func @block_kernel(%arg0: i32, %arg1: memref<1x8x48xf32, #tpu.memory_space<vmem>>, %arg2: memref<1x48xf32, #tpu.memory_space<vmem>>, %arg3: memref<1x48xf32, #tpu.memory_space<vmem>>, %arg4: memref<6x48x24xbf16, #tpu.memory_space<vmem>>, %arg5: memref<6x8x48xbf16, #tpu.memory_space<vmem>>, %arg6: memref<1x48xf32, #tpu.memory_space<vmem>>, %arg7: memref<1x48xf32, #tpu.memory_space<vmem>>, %arg8: memref<1x48xf32, #tpu.memory_space<vmem>>, %arg9: memref<48x192xbf16, #tpu.memory_space<vmem>>, %arg10: memref<1x192xf32, #tpu.memory_space<vmem>>, %arg11: memref<192x48xbf16, #tpu.memory_space<vmem>>, %arg12: memref<1x48xf32, #tpu.memory_space<vmem>>, %arg13: memref<1x8x48xf32, #tpu.memory_space<vmem>>) attributes {dimension_semantics = [#tpu.dimension_semantics<parallel>], iteration_bounds = array<i64: 2>, scalar_prefetch = 0 : i64, scratch_operands = 0 : i64, tpu.core_type = #tpu.core_type<tc>, window_params = [{transform_indices = @transform_0, window_bounds = array<i64: 1, 8, 48>}, {pipeline_mode = #tpu.pipeline_mode<synchronous>, transform_indices = @transform_1, window_bounds = array<i64: 1, 48>}, {pipeline_mode = #tpu.pipeline_mode<synchronous>, transform_indices = @transform_2, window_bounds = array<i64: 1, 48>}, {pipeline_mode = #tpu.pipeline_mode<synchronous>, transform_indices = @transform_3, window_bounds = array<i64: 6, 48, 24>}, {pipeline_mode = #tpu.pipeline_mode<synchronous>, transform_indices = @transform_4, window_bounds = array<i64: 6, 8, 48>}, {pipeline_mode = #tpu.pipeline_mode<synchronous>, transform_indices = @transform_5, window_bounds = array<i64: 1, 48>}, {pipeline_mode = #tpu.pipeline_mode<synchronous>, transform_indices = @transform_6, window_bounds = array<i64: 1, 48>}, {pipeline_mode = #tpu.pipeline_mode<synchronous>, transform_indices = @transform_7, window_bounds = array<i64: 1, 48>}, {pipeline_mode = #tpu.pipeline_mode<synchronous>, transform_indices = @transform_8, window_bounds = array<i64: 48, 192>}, {pipeline_mode = #tpu.pipeline_mode<synchronous>, transform_indices = @transform_9, window_bounds = array<i64: 1, 192>}, {pipeline_mode = #tpu.pipeline_mode<synchronous>, transform_indices = @transform_10, window_bounds = array<i64: 192, 48>}, {pipeline_mode = #tpu.pipeline_mode<synchronous>, transform_indices = @transform_11, window_bounds = array<i64: 1, 48>}, {transform_indices = @transform_12, window_bounds = array<i64: 1, 8, 48>}]} {
    %c0 = arith.constant 0 : index
    %c0_0 = arith.constant 0 : index
    %c0_1 = arith.constant 0 : index
    %0 = vector.load %arg1[%c0, %c0_0, %c0_1] : memref<1x8x48xf32, #tpu.memory_space<vmem>>, vector<1x8x48xf32>
    %1 = vector.shape_cast %0 : vector<1x8x48xf32> to vector<8x48xf32>
    %c0_2 = arith.constant 0 : index
    %c0_3 = arith.constant 0 : index
    %2 = vector.load %arg2[%c0_2, %c0_3] : memref<1x48xf32, #tpu.memory_space<vmem>>, vector<1x48xf32>
    %3 = vector.shape_cast %2 : vector<1x48xf32> to vector<48xf32>
    %c0_4 = arith.constant 0 : index
    %c0_5 = arith.constant 0 : index
    %4 = vector.load %arg3[%c0_4, %c0_5] : memref<1x48xf32, #tpu.memory_space<vmem>>, vector<1x48xf32>
    %5 = vector.shape_cast %4 : vector<1x48xf32> to vector<48xf32>
    %cst = arith.constant dense<0.000000e+00> : vector<8xf32>
    %6 = vector.multi_reduction <add>, %1, %cst [1] : vector<8x48xf32> to vector<8xf32>
    %7 = vector.shape_cast %6 : vector<8xf32> to vector<8x1xf32>
    %cst_6 = arith.constant 4.800000e+01 : f32
    %8 = vector.broadcast %cst_6 : f32 to vector<8x1xf32>
    %9 = arith.divf %7, %8 : vector<8x1xf32>
    %10 = vector.broadcast %9 : vector<8x1xf32> to vector<8x48xf32>
    %11 = arith.subf %1, %10 : vector<8x48xf32>
    %12 = arith.mulf %11, %11 : vector<8x48xf32>
    %cst_7 = arith.constant dense<0.000000e+00> : vector<8xf32>
    %13 = vector.multi_reduction <add>, %12, %cst_7 [1] : vector<8x48xf32> to vector<8xf32>
    %14 = vector.shape_cast %13 : vector<8xf32> to vector<8x1xf32>
    %cst_8 = arith.constant 4.800000e+01 : f32
    %15 = vector.broadcast %cst_8 : f32 to vector<8x1xf32>
    %16 = arith.divf %14, %15 : vector<8x1xf32>
    %17 = vector.broadcast %9 : vector<8x1xf32> to vector<8x48xf32>
    %18 = arith.subf %1, %17 : vector<8x48xf32>
    %cst_9 = arith.constant 9.99999974E-6 : f32
    %19 = vector.broadcast %cst_9 : f32 to vector<8x1xf32>
    %20 = arith.addf %16, %19 : vector<8x1xf32>
    %21 = math.rsqrt %20 : vector<8x1xf32>
    %22 = vector.broadcast %21 : vector<8x1xf32> to vector<8x48xf32>
    %23 = arith.mulf %18, %22 : vector<8x48xf32>
    %24 = vector.shape_cast %3 : vector<48xf32> to vector<1x48xf32>
    %25 = vector.broadcast %24 : vector<1x48xf32> to vector<8x48xf32>
    %26 = arith.mulf %23, %25 : vector<8x48xf32>
    %27 = vector.shape_cast %5 : vector<48xf32> to vector<1x48xf32>
    %28 = vector.broadcast %27 : vector<1x48xf32> to vector<8x48xf32>
    %29 = arith.addf %26, %28 : vector<8x48xf32>
    %30 = arith.truncf %29 : vector<8x48xf32> to vector<8x48xbf16>
    %31 = vector.shape_cast %30 : vector<8x48xbf16> to vector<1x8x48xbf16>
    %32 = vector.shape_cast %31 : vector<1x8x48xbf16> to vector<1x8x48xbf16>
    %33 = vector.broadcast %32 : vector<1x8x48xbf16> to vector<6x8x48xbf16>
    %c0_10 = arith.constant 0 : index
    %c0_11 = arith.constant 0 : index
    %c0_12 = arith.constant 0 : index
    %34 = vector.load %arg4[%c0_10, %c0_11, %c0_12] : memref<6x48x24xbf16, #tpu.memory_space<vmem>>, vector<6x48x24xbf16>
    "tpu.trace_start"() <{level = 10 : i32, message = "htc,hcd->htd"}> : () -> ()
    %cst_13 = arith.constant dense<0.000000e+00> : vector<6x8x24xf32>
    %35 = tpu.matmul %33, %34, %cst_13 {dimension_numbers = #tpu.dot_dimension_numbers<[2], [1], [1], [2], [0, 0, 0, 1, 1, 2], [0], [0]>} : vector<6x8x48xbf16>, vector<6x48x24xbf16>, vector<6x8x24xf32> -> vector<6x8x24xf32>
    "tpu.trace_stop"() : () -> ()
    %36 = vector.extract_strided_slice %35 {offsets = [0, 0, 0], sizes = [6, 8, 8], strides = [1, 1, 1]} : vector<6x8x24xf32> to vector<6x8x8xf32>
    %37 = vector.extract_strided_slice %35 {offsets = [0, 0, 8], sizes = [6, 8, 8], strides = [1, 1, 1]} : vector<6x8x24xf32> to vector<6x8x8xf32>
    %38 = vector.extract_strided_slice %35 {offsets = [0, 0, 16], sizes = [6, 8, 8], strides = [1, 1, 1]} : vector<6x8x24xf32> to vector<6x8x8xf32>
    %39 = tpu.iota {dimensions = array<i32: 0>} : vector<8x8xi32>
    %40 = tpu.iota {dimensions = array<i32: 1>} : vector<8x8xi32>
    %41 = arith.cmpi sge, %39, %40 : vector<8x8xi32>
    %cst_14 = arith.constant 0.000000e+00 : f32
    %cst_15 = arith.constant -1.000000e+30 : f32
    %42 = vector.broadcast %cst_14 : f32 to vector<8x8xf32>
    %43 = vector.broadcast %cst_15 : f32 to vector<8x8xf32>
    %44 = arith.select %41, %42, %43 : vector<8x8xi1>, vector<8x8xf32>
    %45 = arith.truncf %36 : vector<6x8x8xf32> to vector<6x8x8xbf16>
    %46 = arith.truncf %37 : vector<6x8x8xf32> to vector<6x8x8xbf16>
    "tpu.trace_start"() <{level = 10 : i32, message = "htd,hsd->hts"}> : () -> ()
    %cst_16 = arith.constant dense<0.000000e+00> : vector<6x8x8xf32>
    %47 = tpu.matmul %45, %46, %cst_16 {dimension_numbers = #tpu.dot_dimension_numbers<[2], [2], [1], [1], [0, 0, 0, 1, 1, 1], [0], [0]>} : vector<6x8x8xbf16>, vector<6x8x8xbf16>, vector<6x8x8xf32> -> vector<6x8x8xf32>
    "tpu.trace_stop"() : () -> ()
    %cst_17 = arith.constant 0.144337565 : f32
    %48 = vector.broadcast %cst_17 : f32 to vector<6x8x8xf32>
    %49 = arith.mulf %47, %48 : vector<6x8x8xf32>
    %50 = vector.shape_cast %44 : vector<8x8xf32> to vector<1x8x8xf32>
    %51 = vector.broadcast %50 : vector<1x8x8xf32> to vector<6x8x8xf32>
    %52 = arith.addf %49, %51 : vector<6x8x8xf32>
    %cst_18 = arith.constant dense<0xFF800000> : vector<6x8xf32>
    %53 = vector.multi_reduction <maximumf>, %52, %cst_18 [2] : vector<6x8x8xf32> to vector<6x8xf32>
    %54 = vector.shape_cast %53 : vector<6x8xf32> to vector<6x8x1xf32>
    %55 = vector.broadcast %54 : vector<6x8x1xf32> to vector<6x8x8xf32>
    %56 = arith.subf %52, %55 : vector<6x8x8xf32>
    %57 = math.exp %56 : vector<6x8x8xf32>
    %cst_19 = arith.constant dense<0.000000e+00> : vector<6x8xf32>
    %58 = vector.multi_reduction <add>, %57, %cst_19 [2] : vector<6x8x8xf32> to vector<6x8xf32>
    %59 = vector.shape_cast %58 : vector<6x8xf32> to vector<6x8x1xf32>
    %60 = tpu.reciprocal %59 {approx = true} : vector<6x8x1xf32> -> vector<6x8x1xf32>
    %61 = vector.broadcast %60 : vector<6x8x1xf32> to vector<6x8x8xf32>
    %62 = arith.mulf %57, %61 : vector<6x8x8xf32>
    %63 = arith.truncf %62 : vector<6x8x8xf32> to vector<6x8x8xbf16>
    %64 = arith.truncf %38 : vector<6x8x8xf32> to vector<6x8x8xbf16>
    "tpu.trace_start"() <{level = 10 : i32, message = "hts,hsd->htd"}> : () -> ()
    %cst_20 = arith.constant dense<0.000000e+00> : vector<6x8x8xf32>
    %65 = tpu.matmul %63, %64, %cst_20 {dimension_numbers = #tpu.dot_dimension_numbers<[2], [1], [1], [2], [0, 0, 0, 1, 1, 2], [0], [0]>} : vector<6x8x8xbf16>, vector<6x8x8xbf16>, vector<6x8x8xf32> -> vector<6x8x8xf32>
    "tpu.trace_stop"() : () -> ()
    %66 = arith.truncf %65 : vector<6x8x8xf32> to vector<6x8x8xbf16>
    %c0_21 = arith.constant 0 : index
    %c0_22 = arith.constant 0 : index
    %c0_23 = arith.constant 0 : index
    %67 = vector.load %arg5[%c0_21, %c0_22, %c0_23] : memref<6x8x48xbf16, #tpu.memory_space<vmem>>, vector<6x8x48xbf16>
    "tpu.trace_start"() <{level = 10 : i32, message = "htd,hdc->htc"}> : () -> ()
    %cst_24 = arith.constant dense<0.000000e+00> : vector<6x8x48xf32>
    %68 = tpu.matmul %66, %67, %cst_24 {dimension_numbers = #tpu.dot_dimension_numbers<[2], [1], [1], [2], [0, 0, 0, 1, 1, 2], [0], [0]>} : vector<6x8x8xbf16>, vector<6x8x48xbf16>, vector<6x8x48xf32> -> vector<6x8x48xf32>
    "tpu.trace_stop"() : () -> ()
    %cst_25 = arith.constant dense<0.000000e+00> : vector<8x48xf32>
    %69 = vector.multi_reduction <add>, %68, %cst_25 [0] : vector<6x8x48xf32> to vector<8x48xf32>
    %c0_26 = arith.constant 0 : index
    %c0_27 = arith.constant 0 : index
    %70 = vector.load %arg6[%c0_26, %c0_27] : memref<1x48xf32, #tpu.memory_space<vmem>>, vector<1x48xf32>
    %71 = vector.shape_cast %70 : vector<1x48xf32> to vector<48xf32>
    %72 = vector.shape_cast %71 : vector<48xf32> to vector<1x48xf32>
    %73 = vector.broadcast %72 : vector<1x48xf32> to vector<8x48xf32>
    %74 = arith.addf %69, %73 : vector<8x48xf32>
    %75 = arith.addf %1, %74 : vector<8x48xf32>
    %c0_28 = arith.constant 0 : index
    %c0_29 = arith.constant 0 : index
    %76 = vector.load %arg7[%c0_28, %c0_29] : memref<1x48xf32, #tpu.memory_space<vmem>>, vector<1x48xf32>
    %77 = vector.shape_cast %76 : vector<1x48xf32> to vector<48xf32>
    %c0_30 = arith.constant 0 : index
    %c0_31 = arith.constant 0 : index
    %78 = vector.load %arg8[%c0_30, %c0_31] : memref<1x48xf32, #tpu.memory_space<vmem>>, vector<1x48xf32>
    %79 = vector.shape_cast %78 : vector<1x48xf32> to vector<48xf32>
    %cst_32 = arith.constant dense<0.000000e+00> : vector<8xf32>
    %80 = vector.multi_reduction <add>, %75, %cst_32 [1] : vector<8x48xf32> to vector<8xf32>
    %81 = vector.shape_cast %80 : vector<8xf32> to vector<8x1xf32>
    %cst_33 = arith.constant 4.800000e+01 : f32
    %82 = vector.broadcast %cst_33 : f32 to vector<8x1xf32>
    %83 = arith.divf %81, %82 : vector<8x1xf32>
    %84 = vector.broadcast %83 : vector<8x1xf32> to vector<8x48xf32>
    %85 = arith.subf %75, %84 : vector<8x48xf32>
    %86 = arith.mulf %85, %85 : vector<8x48xf32>
    %cst_34 = arith.constant dense<0.000000e+00> : vector<8xf32>
    %87 = vector.multi_reduction <add>, %86, %cst_34 [1] : vector<8x48xf32> to vector<8xf32>
    %88 = vector.shape_cast %87 : vector<8xf32> to vector<8x1xf32>
    %cst_35 = arith.constant 4.800000e+01 : f32
    %89 = vector.broadcast %cst_35 : f32 to vector<8x1xf32>
    %90 = arith.divf %88, %89 : vector<8x1xf32>
    %91 = vector.broadcast %83 : vector<8x1xf32> to vector<8x48xf32>
    %92 = arith.subf %75, %91 : vector<8x48xf32>
    %cst_36 = arith.constant 9.99999974E-6 : f32
    %93 = vector.broadcast %cst_36 : f32 to vector<8x1xf32>
    %94 = arith.addf %90, %93 : vector<8x1xf32>
    %95 = math.rsqrt %94 : vector<8x1xf32>
    %96 = vector.broadcast %95 : vector<8x1xf32> to vector<8x48xf32>
    %97 = arith.mulf %92, %96 : vector<8x48xf32>
    %98 = vector.shape_cast %77 : vector<48xf32> to vector<1x48xf32>
    %99 = vector.broadcast %98 : vector<1x48xf32> to vector<8x48xf32>
    %100 = arith.mulf %97, %99 : vector<8x48xf32>
    %101 = vector.shape_cast %79 : vector<48xf32> to vector<1x48xf32>
    %102 = vector.broadcast %101 : vector<1x48xf32> to vector<8x48xf32>
    %103 = arith.addf %100, %102 : vector<8x48xf32>
    %104 = arith.truncf %103 : vector<8x48xf32> to vector<8x48xbf16>
    %c0_37 = arith.constant 0 : index
    %c0_38 = arith.constant 0 : index
    %105 = vector.load %arg9[%c0_37, %c0_38] : memref<48x192xbf16, #tpu.memory_space<vmem>>, vector<48x192xbf16>
    %cst_39 = arith.constant dense<0.000000e+00> : vector<8x192xf32>
    %106 = tpu.matmul %104, %105, %cst_39 {dimension_numbers = #tpu.dot_dimension_numbers<[1], [0], [0], [1], [0, 0, 1, 1], [], []>} : vector<8x48xbf16>, vector<48x192xbf16>, vector<8x192xf32> -> vector<8x192xf32>
    %c0_40 = arith.constant 0 : index
    %c0_41 = arith.constant 0 : index
    %107 = vector.load %arg10[%c0_40, %c0_41] : memref<1x192xf32, #tpu.memory_space<vmem>>, vector<1x192xf32>
    %108 = vector.shape_cast %107 : vector<1x192xf32> to vector<192xf32>
    %109 = vector.shape_cast %108 : vector<192xf32> to vector<1x192xf32>
    %110 = vector.broadcast %109 : vector<1x192xf32> to vector<8x192xf32>
    %111 = arith.addf %106, %110 : vector<8x192xf32>
    %cst_42 = arith.constant 0.000000e+00 : f32
    %112 = vector.broadcast %cst_42 : f32 to vector<8x192xf32>
    %113 = arith.maximumf %111, %112 : vector<8x192xf32>
    %114 = arith.truncf %113 : vector<8x192xf32> to vector<8x192xbf16>
    %c0_43 = arith.constant 0 : index
    %c0_44 = arith.constant 0 : index
    %115 = vector.load %arg11[%c0_43, %c0_44] : memref<192x48xbf16, #tpu.memory_space<vmem>>, vector<192x48xbf16>
    %cst_45 = arith.constant dense<0.000000e+00> : vector<8x48xf32>
    %116 = tpu.matmul %114, %115, %cst_45 {dimension_numbers = #tpu.dot_dimension_numbers<[1], [0], [0], [1], [0, 0, 1, 1], [], []>} : vector<8x192xbf16>, vector<192x48xbf16>, vector<8x48xf32> -> vector<8x48xf32>
    %c0_46 = arith.constant 0 : index
    %c0_47 = arith.constant 0 : index
    %117 = vector.load %arg12[%c0_46, %c0_47] : memref<1x48xf32, #tpu.memory_space<vmem>>, vector<1x48xf32>
    %118 = vector.shape_cast %117 : vector<1x48xf32> to vector<48xf32>
    %119 = vector.shape_cast %118 : vector<48xf32> to vector<1x48xf32>
    %120 = vector.broadcast %119 : vector<1x48xf32> to vector<8x48xf32>
    %121 = arith.addf %116, %120 : vector<8x48xf32>
    %122 = arith.addf %75, %121 : vector<8x48xf32>
    %c0_48 = arith.constant 0 : index
    %c0_49 = arith.constant 0 : index
    %c0_50 = arith.constant 0 : index
    %123 = vector.load %arg13[%c0_48, %c0_49, %c0_50] : memref<1x8x48xf32, #tpu.memory_space<vmem>>, vector<1x8x48xf32>
    %124 = vector.shape_cast %123 : vector<1x8x48xf32> to vector<8x48xf32>
    %125 = vector.shape_cast %122 : vector<8x48xf32> to vector<1x8x48xf32>
    tpu.vector_store %arg13[%c0_48, %c0_49, %c0_50], %125 {strides = array<i32>} : memref<1x8x48xf32, #tpu.memory_space<vmem>>, vector<1x8x48xf32>,
    return
  }
  func.func @transform_0(%arg0: i32) -> (i32, i32, i32) {
    %c0_i32 = arith.constant 0 : i32
    %c0_i32_0 = arith.constant 0 : i32
    %c0_i32_1 = arith.constant 0 : i32
    return %arg0, %c0_i32, %c0_i32_0 : i32, i32, i32
  }
  func.func @transform_1(%arg0: i32) -> (i32, i32) {
    %c0_i32 = arith.constant 0 : i32
    %c0_i32_0 = arith.constant 0 : i32
    %c0_i32_1 = arith.constant 0 : i32
    return %c0_i32, %c0_i32_0 : i32, i32
  }
  func.func @transform_2(%arg0: i32) -> (i32, i32) {
    %c0_i32 = arith.constant 0 : i32
    %c0_i32_0 = arith.constant 0 : i32
    %c0_i32_1 = arith.constant 0 : i32
    return %c0_i32, %c0_i32_0 : i32, i32
  }
  func.func @transform_3(%arg0: i32) -> (i32, i32, i32) {
    %c0_i32 = arith.constant 0 : i32
    %c0_i32_0 = arith.constant 0 : i32
    %c0_i32_1 = arith.constant 0 : i32
    %c0_i32_2 = arith.constant 0 : i32
    return %c0_i32, %c0_i32_0, %c0_i32_1 : i32, i32, i32
  }
  func.func @transform_4(%arg0: i32) -> (i32, i32, i32) {
    %c0_i32 = arith.constant 0 : i32
    %c0_i32_0 = arith.constant 0 : i32
    %c0_i32_1 = arith.constant 0 : i32
    %c0_i32_2 = arith.constant 0 : i32
    return %c0_i32, %c0_i32_0, %c0_i32_1 : i32, i32, i32
  }
  func.func @transform_5(%arg0: i32) -> (i32, i32) {
    %c0_i32 = arith.constant 0 : i32
    %c0_i32_0 = arith.constant 0 : i32
    %c0_i32_1 = arith.constant 0 : i32
    return %c0_i32, %c0_i32_0 : i32, i32
  }
  func.func @transform_6(%arg0: i32) -> (i32, i32) {
    %c0_i32 = arith.constant 0 : i32
    %c0_i32_0 = arith.constant 0 : i32
    %c0_i32_1 = arith.constant 0 : i32
    return %c0_i32, %c0_i32_0 : i32, i32
  }
  func.func @transform_7(%arg0: i32) -> (i32, i32) {
    %c0_i32 = arith.constant 0 : i32
    %c0_i32_0 = arith.constant 0 : i32
    %c0_i32_1 = arith.constant 0 : i32
    return %c0_i32, %c0_i32_0 : i32, i32
  }
  func.func @transform_8(%arg0: i32) -> (i32, i32) {
    %c0_i32 = arith.constant 0 : i32
    %c0_i32_0 = arith.constant 0 : i32
    %c0_i32_1 = arith.constant 0 : i32
    return %c0_i32, %c0_i32_0 : i32, i32
  }
  func.func @transform_9(%arg0: i32) -> (i32, i32) {
    %c0_i32 = arith.constant 0 : i32
    %c0_i32_0 = arith.constant 0 : i32
    %c0_i32_1 = arith.constant 0 : i32
    return %c0_i32, %c0_i32_0 : i32, i32
  }
  func.func @transform_10(%arg0: i32) -> (i32, i32) {
    %c0_i32 = arith.constant 0 : i32
    %c0_i32_0 = arith.constant 0 : i32
    %c0_i32_1 = arith.constant 0 : i32
    return %c0_i32, %c0_i32_0 : i32, i32
  }
  func.func @transform_11(%arg0: i32) -> (i32, i32) {
    %c0_i32 = arith.constant 0 : i32
    %c0_i32_0 = arith.constant 0 : i32
    %c0_i32_1 = arith.constant 0 : i32
    return %c0_i32, %c0_i32_0 : i32, i32
  }
  func.func @transform_12(%arg0: i32) -> (i32, i32, i32) {
    %c0_i32 = arith.constant 0 : i32
    %c0_i32_0 = arith.constant 0 : i32
    %c0_i32_1 = arith.constant 0 : i32
    return %arg0, %c0_i32, %c0_i32_0 : i32, i32, i32
  }
}

</mosaic_0001>

<llo_original>
// kernel: tpu_custom_call.1
$region0: #{tpu_custom_call.1}
  #allocation0 [shape = 'u32[]', space=smem, size = 0x4, offset = 0x4, fixed_abs, tag = 'smem constant byte address 0x4 - core index']
  #allocation1 [shape = 'u32[72,128]{1,0:T(1,128)}', space=vmem, size = 0x9000, scoped, tag = 'internal scratch']
  %s0 = inlined_call_operand.vmem [shape: f32[2,8,48], index: 0, kind: input, shape index: {}]
  %s1 = inlined_call_operand.vmem [shape: f32[1,48], index: 1, kind: input, shape index: {}]
  %s2 = inlined_call_operand.vmem [shape: f32[1,48], index: 2, kind: input, shape index: {}]
  %s3 = inlined_call_operand.vmem [shape: bf16[6,48,24], index: 3, kind: input, shape index: {}]
  %s4 = inlined_call_operand.vmem [shape: bf16[6,8,48], index: 4, kind: input, shape index: {}]
  %s5 = inlined_call_operand.vmem [shape: f32[1,48], index: 5, kind: input, shape index: {}]
  %s6 = inlined_call_operand.vmem [shape: f32[1,48], index: 6, kind: input, shape index: {}]
  %s7 = inlined_call_operand.vmem [shape: f32[1,48], index: 7, kind: input, shape index: {}]
  %s8 = inlined_call_operand.vmem [shape: bf16[48,192], index: 8, kind: input, shape index: {}]
  %s9 = inlined_call_operand.vmem [shape: f32[1,192], index: 9, kind: input, shape index: {}]
  %s10 = inlined_call_operand.vmem [shape: bf16[192,48], index: 10, kind: input, shape index: {}]
  %s11 = inlined_call_operand.vmem [shape: f32[1,48], index: 11, kind: input, shape index: {}]
  %s12 = inlined_call_operand.hbm [shape: f32[2,8,48], index: 12, kind: output, shape index: {}]
  %s13 = sld [smem:[#allocation0]]
  $region81: #{tpu_custom_call.1} parent=0
    _
  %s15 = ssub.s32 1, %s13
  %s16 = scalar_select 0, %s15, %s13
  $region1: #{tpu_custom_call.1} parent=0
    #allocation2 [shape = 'u8[8192]{0}', space=vmem, size = 0x2000, scoped, tag = 'output window, operand 0']
    #allocation3 [shape = 's32[2]{0}', space=sflag, size = 0x8, scoped, tag = 'scoped memory for tpu_custom_call.1']
    %17 = vsyncpa [#allocation3], 0
    %s18 = scalar_lea.sflag [#allocation3], 1
    %19 = vsyncpa %s18, 0
    loop: start=0, step=1, limit=4
    $region2: #{tpu_custom_call.1} parent=1 // loop_pre_header
      _
    $region3: #{tpu_custom_call.1} parent=1 // loop_header
      %s21 = sphi 0, %s25
      %p22 = scmp.ge.s32.totalorder %s21, 4
      %s31 = sphi 0, %s33
      %s34 = sphi 0, %s31
      %s35 = sphi 0, %s34
      %s51 = sphi 0, %s35
      %s55 = sphi 0, %s55
      %s57 = sphi 0, %s55
      %s58 = sphi 0, %s57
      %s72 = sphi 0, %s58
      %s76 = sphi 0, %s76
      %s78 = sphi 0, %s76
      %s79 = sphi 0, %s78
      %s93 = sphi 0, %s79
      %s97 = sphi 0, %s97
      %s99 = sphi 0, %s97
      %s100 = sphi 0, %s99
      %s114 = sphi 0, %s100
      %s118 = sphi 0, %s118
      %s120 = sphi 0, %s118
      %s121 = sphi 0, %s120
      %s135 = sphi 0, %s121
      %s139 = sphi 0, %s139
      %s141 = sphi 0, %s139
      %s142 = sphi 0, %s141
      %s156 = sphi 0, %s142
      %s160 = sphi 0, %s160
      %s162 = sphi 0, %s160
      %s163 = sphi 0, %s162
      %s177 = sphi 0, %s163
      %s181 = sphi 0, %s181
      %s183 = sphi 0, %s181
      %s184 = sphi 0, %s183
      %s198 = sphi 0, %s184
      %s202 = sphi 0, %s202
      %s204 = sphi 0, %s202
      %s205 = sphi 0, %s204
      %s219 = sphi 0, %s205
      %s223 = sphi 0, %s223
      %s225 = sphi 0, %s223
      %s226 = sphi 0, %s225
      %s240 = sphi 0, %s226
      %s244 = sphi 0, %s244
      %s246 = sphi 0, %s244
      %s247 = sphi 0, %s246
      %s261 = sphi 0, %s247
      %s265 = sphi 0, %s265
      %s267 = sphi 0, %s265
      %s268 = sphi 0, %s267
      %s282 = sphi 0, %s268
      %s288 = sphi 0, %s290
      %s291 = sphi 0, %s288
      %s292 = sphi 0, %s291
      %s308 = sphi 0, %s292
    $region4: #{tpu_custom_call.1} parent=1 // loop_header_branch
      %24 = sbr.rel (%p22) target = $region8
    $region5: #{tpu_custom_call.1} parent=1 // loop_body
      %s26 = ssub.s32 %s21, 1
      %s27 = ssub.s32 %s21, 2
      %s28 = sadd.s32 %s21, 1
      %s29 = ssub.s32 %s21, %s28
      %p30 = scmp.eq.s32.totalorder %s29, 0
      %s32 = sadd.s32 %s31, 1
      %s33 = scalar_select %p30, %s31, %s32
      %p36 = pneg %p30
      %p37 = scmp.eq.s32.totalorder %s21, 1
      %p38 = por %p36, %p37
      %p39 = scmp.ne.s32.totalorder %s31, %s34
      %p40 = scmp.eq.s32.totalorder %s21, 0
      %p41 = por %p39, %p40
      %p42 = scmp.ne.s32.totalorder %s31, %s34
      %p43 = scmp.eq.s32.totalorder %s26, 1
      %p44 = por %p42, %p43
      %p45 = scmp.ne.s32.totalorder %s34, %s35
      %p46 = scmp.eq.s32.totalorder %s26, 0
      %p47 = por %p45, %p46
      %p48 = scmp.ne.s32.totalorder %s34, %s35
      %p49 = scmp.eq.s32.totalorder %s27, 1
      %p50 = por %p48, %p49
      %p52 = scmp.ne.s32.totalorder %s35, %s51
      %p53 = scmp.eq.s32.totalorder %s27, 0
      %p54 = por %p52, %p53
      %s56 = sadd.s32 %s55, 1
      %p59 = scmp.eq.s32.totalorder %s21, 1
      %p60 = scmp.ne.s32.totalorder %s55, %s57
      %p61 = scmp.eq.s32.totalorder %s21, 0
      %p62 = por %p60, %p61
      %p63 = scmp.ne.s32.totalorder %s55, %s57
      %p64 = scmp.eq.s32.totalorder %s26, 1
      %p65 = por %p63, %p64
      %p66 = scmp.ne.s32.totalorder %s57, %s58
      %p67 = scmp.eq.s32.totalorder %s26, 0
      %p68 = por %p66, %p67
      %p69 = scmp.ne.s32.totalorder %s57, %s58
      %p70 = scmp.eq.s32.totalorder %s27, 1
      %p71 = por %p69, %p70
      %p73 = scmp.ne.s32.totalorder %s58, %s72
      %p74 = scmp.eq.s32.totalorder %s27, 0
      %p75 = por %p73, %p74
      %s77 = sadd.s32 %s76, 1
      %p80 = scmp.eq.s32.totalorder %s21, 1
      %p81 = scmp.ne.s32.totalorder %s76, %s78
      %p82 = scmp.eq.s32.totalorder %s21, 0
      %p83 = por %p81, %p82
      %p84 = scmp.ne.s32.totalorder %s76, %s78
      %p85 = scmp.eq.s32.totalorder %s26, 1
      %p86 = por %p84, %p85
      %p87 = scmp.ne.s32.totalorder %s78, %s79
      %p88 = scmp.eq.s32.totalorder %s26, 0
      %p89 = por %p87, %p88
      %p90 = scmp.ne.s32.totalorder %s78, %s79
      %p91 = scmp.eq.s32.totalorder %s27, 1
      %p92 = por %p90, %p91
      %p94 = scmp.ne.s32.totalorder %s79, %s93
      %p95 = scmp.eq.s32.totalorder %s27, 0
      %p96 = por %p94, %p95
      %s98 = sadd.s32 %s97, 1
      %p101 = scmp.eq.s32.totalorder %s21, 1
      %p102 = scmp.ne.s32.totalorder %s97, %s99
      %p103 = scmp.eq.s32.totalorder %s21, 0
      %p104 = por %p102, %p103
      %p105 = scmp.ne.s32.totalorder %s97, %s99
      %p106 = scmp.eq.s32.totalorder %s26, 1
      %p107 = por %p105, %p106
      %p108 = scmp.ne.s32.totalorder %s99, %s100
      %p109 = scmp.eq.s32.totalorder %s26, 0
      %p110 = por %p108, %p109
      %p111 = scmp.ne.s32.totalorder %s99, %s100
      %p112 = scmp.eq.s32.totalorder %s27, 1
      %p113 = por %p111, %p112
      %p115 = scmp.ne.s32.totalorder %s100, %s114
      %p116 = scmp.eq.s32.totalorder %s27, 0
      %p117 = por %p115, %p116
      %s119 = sadd.s32 %s118, 1
      %p122 = scmp.eq.s32.totalorder %s21, 1
      %p123 = scmp.ne.s32.totalorder %s118, %s120
      %p124 = scmp.eq.s32.totalorder %s21, 0
      %p125 = por %p123, %p124
      %p126 = scmp.ne.s32.totalorder %s118, %s120
      %p127 = scmp.eq.s32.totalorder %s26, 1
      %p128 = por %p126, %p127
      %p129 = scmp.ne.s32.totalorder %s120, %s121
      %p130 = scmp.eq.s32.totalorder %s26, 0
      %p131 = por %p129, %p130
      %p132 = scmp.ne.s32.totalorder %s120, %s121
      %p133 = scmp.eq.s32.totalorder %s27, 1
      %p134 = por %p132, %p133
      %p136 = scmp.ne.s32.totalorder %s121, %s135
      %p137 = scmp.eq.s32.totalorder %s27, 0
      %p138 = por %p136, %p137
      %s140 = sadd.s32 %s139, 1
      %p143 = scmp.eq.s32.totalorder %s21, 1
      %p144 = scmp.ne.s32.totalorder %s139, %s141
      %p145 = scmp.eq.s32.totalorder %s21, 0
      %p146 = por %p144, %p145
      %p147 = scmp.ne.s32.totalorder %s139, %s141
      %p148 = scmp.eq.s32.totalorder %s26, 1
      %p149 = por %p147, %p148
      %p150 = scmp.ne.s32.totalorder %s141, %s142
      %p151 = scmp.eq.s32.totalorder %s26, 0
      %p152 = por %p150, %p151
      %p153 = scmp.ne.s32.totalorder %s141, %s142
      %p154 = scmp.eq.s32.totalorder %s27, 1
      %p155 = por %p153, %p154
      %p157 = scmp.ne.s32.totalorder %s142, %s156
      %p158 = scmp.eq.s32.totalorder %s27, 0
      %p159 = por %p157, %p158
      %s161 = sadd.s32 %s160, 1
      %p164 = scmp.eq.s32.totalorder %s21, 1
      %p165 = scmp.ne.s32.totalorder %s160, %s162
      %p166 = scmp.eq.s32.totalorder %s21, 0
      %p167 = por %p165, %p166
      %p168 = scmp.ne.s32.totalorder %s160, %s162
      %p169 = scmp.eq.s32.totalorder %s26, 1
      %p170 = por %p168, %p169
      %p171 = scmp.ne.s32.totalorder %s162, %s163
      %p172 = scmp.eq.s32.totalorder %s26, 0
      %p173 = por %p171, %p172
      %p174 = scmp.ne.s32.totalorder %s162, %s163
      %p175 = scmp.eq.s32.totalorder %s27, 1
      %p176 = por %p174, %p175
      %p178 = scmp.ne.s32.totalorder %s163, %s177
      %p179 = scmp.eq.s32.totalorder %s27, 0
      %p180 = por %p178, %p179
      %s182 = sadd.s32 %s181, 1
      %p185 = scmp.eq.s32.totalorder %s21, 1
      %p186 = scmp.ne.s32.totalorder %s181, %s183
      %p187 = scmp.eq.s32.totalorder %s21, 0
      %p188 = por %p186, %p187
      %p189 = scmp.ne.s32.totalorder %s181, %s183
      %p190 = scmp.eq.s32.totalorder %s26, 1
      %p191 = por %p189, %p190
      %p192 = scmp.ne.s32.totalorder %s183, %s184
      %p193 = scmp.eq.s32.totalorder %s26, 0
      %p194 = por %p192, %p193
      %p195 = scmp.ne.s32.totalorder %s183, %s184
      %p196 = scmp.eq.s32.totalorder %s27, 1
      %p197 = por %p195, %p196
      %p199 = scmp.ne.s32.totalorder %s184, %s198
      %p200 = scmp.eq.s32.totalorder %s27, 0
      %p201 = por %p199, %p200
      %s203 = sadd.s32 %s202, 1
      %p206 = scmp.eq.s32.totalorder %s21, 1
      %p207 = scmp.ne.s32.totalorder %s202, %s204
      %p208 = scmp.eq.s32.totalorder %s21, 0
      %p209 = por %p207, %p208
      %p210 = scmp.ne.s32.totalorder %s202, %s204
      %p211 = scmp.eq.s32.totalorder %s26, 1
      %p212 = por %p210, %p211
      %p213 = scmp.ne.s32.totalorder %s204, %s205
      %p214 = scmp.eq.s32.totalorder %s26, 0
      %p215 = por %p213, %p214
      %p216 = scmp.ne.s32.totalorder %s204, %s205
      %p217 = scmp.eq.s32.totalorder %s27, 1
      %p218 = por %p216, %p217
      %p220 = scmp.ne.s32.totalorder %s205, %s219
      %p221 = scmp.eq.s32.totalorder %s27, 0
      %p222 = por %p220, %p221
      %s224 = sadd.s32 %s223, 1
      %p227 = scmp.eq.s32.totalorder %s21, 1
      %p228 = scmp.ne.s32.totalorder %s223, %s225
      %p229 = scmp.eq.s32.totalorder %s21, 0
      %p230 = por %p228, %p229
      %p231 = scmp.ne.s32.totalorder %s223, %s225
      %p232 = scmp.eq.s32.totalorder %s26, 1
      %p233 = por %p231, %p232
      %p234 = scmp.ne.s32.totalorder %s225, %s226
      %p235 = scmp.eq.s32.totalorder %s26, 0
      %p236 = por %p234, %p235
      %p237 = scmp.ne.s32.totalorder %s225, %s226
      %p238 = scmp.eq.s32.totalorder %s27, 1
      %p239 = por %p237, %p238
      %p241 = scmp.ne.s32.totalorder %s226, %s240
      %p242 = scmp.eq.s32.totalorder %s27, 0
      %p243 = por %p241, %p242
      %s245 = sadd.s32 %s244, 1
      %p248 = scmp.eq.s32.totalorder %s21, 1
      %p249 = scmp.ne.s32.totalorder %s244, %s246
      %p250 = scmp.eq.s32.totalorder %s21, 0
      %p251 = por %p249, %p250
      %p252 = scmp.ne.s32.totalorder %s244, %s246
      %p253 = scmp.eq.s32.totalorder %s26, 1
      %p254 = por %p252, %p253
      %p255 = scmp.ne.s32.totalorder %s246, %s247
      %p256 = scmp.eq.s32.totalorder %s26, 0
      %p257 = por %p255, %p256
      %p258 = scmp.ne.s32.totalorder %s246, %s247
      %p259 = scmp.eq.s32.totalorder %s27, 1
      %p260 = por %p258, %p259
      %p262 = scmp.ne.s32.totalorder %s247, %s261
      %p263 = scmp.eq.s32.totalorder %s27, 0
      %p264 = por %p262, %p263
      %s266 = sadd.s32 %s265, 1
      %p269 = scmp.eq.s32.totalorder %s21, 1
      %p270 = scmp.ne.s32.totalorder %s265, %s267
      %p271 = scmp.eq.s32.totalorder %s21, 0
      %p272 = por %p270, %p271
      %p273 = scmp.ne.s32.totalorder %s265, %s267
      %p274 = scmp.eq.s32.totalorder %s26, 1
      %p275 = por %p273, %p274
      %p276 = scmp.ne.s32.totalorder %s267, %s268
      %p277 = scmp.eq.s32.totalorder %s26, 0
      %p278 = por %p276, %p277
      %p279 = scmp.ne.s32.totalorder %s267, %s268
      %p280 = scmp.eq.s32.totalorder %s27, 1
      %p281 = por %p279, %p280
      %p283 = scmp.ne.s32.totalorder %s268, %s282
      %p284 = scmp.eq.s32.totalorder %s27, 0
      %p285 = por %p283, %p284
      %s286 = ssub.s32 %s21, %s28
      %p287 = scmp.eq.s32.totalorder %s286, 0
      %s289 = sadd.s32 %s288, 1
      %s290 = scalar_select %p287, %s288, %s289
      %p293 = pneg %p287
      %p294 = scmp.eq.s32.totalorder %s21, 1
      %p295 = por %p293, %p294
      %p296 = scmp.ne.s32.totalorder %s288, %s291
      %p297 = scmp.eq.s32.totalorder %s21, 0
      %p298 = por %p296, %p297
      %p299 = scmp.ne.s32.totalorder %s288, %s291
      %p300 = scmp.eq.s32.totalorder %s26, 1
      %p301 = por %p299, %p300
      %p302 = scmp.ne.s32.totalorder %s291, %s292
      %p303 = scmp.eq.s32.totalorder %s26, 0
      %p304 = por %p302, %p303
      %p305 = scmp.ne.s32.totalorder %s291, %s292
      %p306 = scmp.eq.s32.totalorder %s27, 1
      %p307 = por %p305, %p306
      %p309 = scmp.ne.s32.totalorder %s292, %s308
      %p310 = scmp.eq.s32.totalorder %s27, 0
      %p311 = por %p309, %p310
      %p312 = scmp.le.s32.totalorder 1, %s21
      %p313 = scmp.lt.s32.totalorder %s21, 3
      %p314 = pnand %p312, %p313
      %p315 = pneg %p314
      // Predicated region
      $region9: #{tpu_custom_call.1} parent=5 // pred_check
        _
      $region10: #{tpu_custom_call.1} parent=5 // pred_check_branch
        %317 = sbr.rel (%p314) target = $region12
      $region11: #{tpu_custom_call.1} parent=5 // pred_region
        %s318 = ssub.s32 %s21, 1
        // Predicated region
        $region13: #{tpu_custom_call.1} parent=11 // pred_check
          %p319 = pneg %p68
        $region14: #{tpu_custom_call.1} parent=11 // pred_check_branch
          %321 = sbr.rel (%p319) target = $region16
        $region15: #{tpu_custom_call.1} parent=11 // pred_region
          _
        $region16: #{tpu_custom_call.1} parent=11 // pred_fallthru
          _
        // Predicated region
        $region17: #{tpu_custom_call.1} parent=11 // pred_check
          %p322 = pneg %p89
        $region18: #{tpu_custom_call.1} parent=11 // pred_check_branch
          %324 = sbr.rel (%p322) target = $region20
        $region19: #{tpu_custom_call.1} parent=11 // pred_region
          _
        $region20: #{tpu_custom_call.1} parent=11 // pred_fallthru
          _
        // Predicated region
        $region21: #{tpu_custom_call.1} parent=11 // pred_check
          %p325 = pneg %p110
        $region22: #{tpu_custom_call.1} parent=11 // pred_check_branch
          %327 = sbr.rel (%p325) target = $region24
        $region23: #{tpu_custom_call.1} parent=11 // pred_region
          _
        $region24: #{tpu_custom_call.1} parent=11 // pred_fallthru
          _
        // Predicated region
        $region25: #{tpu_custom_call.1} parent=11 // pred_check
          %p328 = pneg %p131
        $region26: #{tpu_custom_call.1} parent=11 // pred_check_branch
          %330 = sbr.rel (%p328) target = $region28
        $region27: #{tpu_custom_call.1} parent=11 // pred_region
          _
        $region28: #{tpu_custom_call.1} parent=11 // pred_fallthru
          _
        // Predicated region
        $region29: #{tpu_custom_call.1} parent=11 // pred_check
          %p331 = pneg %p152
        $region30: #{tpu_custom_call.1} parent=11 // pred_check_branch
          %333 = sbr.rel (%p331) target = $region32
        $region31: #{tpu_custom_call.1} parent=11 // pred_region
          _
        $region32: #{tpu_custom_call.1} parent=11 // pred_fallthru
          _
        // Predicated region
        $region33: #{tpu_custom_call.1} parent=11 // pred_check
          %p334 = pneg %p173
        $region34: #{tpu_custom_call.1} parent=11 // pred_check_branch
          %336 = sbr.rel (%p334) target = $region36
        $region35: #{tpu_custom_call.1} parent=11 // pred_region
          _
        $region36: #{tpu_custom_call.1} parent=11 // pred_fallthru
          _
        // Predicated region
        $region37: #{tpu_custom_call.1} parent=11 // pred_check
          %p337 = pneg %p194
        $region38: #{tpu_custom_call.1} parent=11 // pred_check_branch
          %339 = sbr.rel (%p337) target = $region40
        $region39: #{tpu_custom_call.1} parent=11 // pred_region
          _
        $region40: #{tpu_custom_call.1} parent=11 // pred_fallthru
          _
        // Predicated region
        $region41: #{tpu_custom_call.1} parent=11 // pred_check
          %p340 = pneg %p215
        $region42: #{tpu_custom_call.1} parent=11 // pred_check_branch
          %342 = sbr.rel (%p340) target = $region44
        $region43: #{tpu_custom_call.1} parent=11 // pred_region
          _
        $region44: #{tpu_custom_call.1} parent=11 // pred_fallthru
          _
        // Predicated region
        $region45: #{tpu_custom_call.1} parent=11 // pred_check
          %p343 = pneg %p236
        $region46: #{tpu_custom_call.1} parent=11 // pred_check_branch
          %345 = sbr.rel (%p343) target = $region48
        $region47: #{tpu_custom_call.1} parent=11 // pred_region
          _
        $region48: #{tpu_custom_call.1} parent=11 // pred_fallthru
          _
        // Predicated region
        $region49: #{tpu_custom_call.1} parent=11 // pred_check
          %p346 = pneg %p257
        $region50: #{tpu_custom_call.1} parent=11 // pred_check_branch
          %348 = sbr.rel (%p346) target = $region52
        $region51: #{tpu_custom_call.1} parent=11 // pred_region
          _
        $region52: #{tpu_custom_call.1} parent=11 // pred_fallthru
          _
        // Predicated region
        $region53: #{tpu_custom_call.1} parent=11 // pred_check
          %p349 = pneg %p278
        $region54: #{tpu_custom_call.1} parent=11 // pred_check_branch
          %351 = sbr.rel (%p349) target = $region56
        $region55: #{tpu_custom_call.1} parent=11 // pred_region
          _
        $region56: #{tpu_custom_call.1} parent=11 // pred_fallthru
          _
      $region12: #{tpu_custom_call.1} parent=5 // pred_fallthru
        _
      %p352 = scmp.lt.s32.totalorder %s21, 2
      // Predicated region
      $region57: #{tpu_custom_call.1} parent=5 // pred_check
        %p353 = pneg %p352
      $region58: #{tpu_custom_call.1} parent=5 // pred_check_branch
        %355 = sbr.rel (%p353) target = $region60
      $region59: #{tpu_custom_call.1} parent=5 // pred_region
        // Predicated region
        $region61: #{tpu_custom_call.1} parent=59 // pred_check
          %p356 = pneg %p41
        $region62: #{tpu_custom_call.1} parent=59 // pred_check_branch
          %358 = sbr.rel (%p356) target = $region64
        $region63: #{tpu_custom_call.1} parent=59 // pred_region
          %p359 = scmp.lt.s32.totalorder %s21, 1
          %s360 = scalar_select %p359, %s21, 1
          %s361 = smul.addr %s360, 8
          %s362 = scalar_lea.vmem %s0, %s361
        $region64: #{tpu_custom_call.1} parent=59 // pred_fallthru
          _
      $region60: #{tpu_custom_call.1} parent=5 // pred_fallthru
        _
      %p363 = scmp.le.s32.totalorder 1, %s21
      %p364 = scmp.lt.s32.totalorder %s21, 3
      %p365 = pnand %p363, %p364
      %p366 = pneg %p365
      // Predicated region
      $region65: #{tpu_custom_call.1} parent=5 // pred_check
        _
      $region66: #{tpu_custom_call.1} parent=5 // pred_check_branch
        %368 = sbr.rel (%p365) target = $region68
      $region67: #{tpu_custom_call.1} parent=5 // pred_region
        %s369 = ssub.s32 %s21, 1
        %p370 = scmp.lt.s32.totalorder %s26, 1
        %s371 = scalar_select %p370, %s26, 1
        %s372 = smul.addr %s371, 8
        %s373 = scalar_lea.vmem %s0, %s372
        %p374 = pneg %p47
        %p375 = pneg %p44
        %p376 = pneg %p68
        %p377 = pneg %p65
        %p378 = pneg %p89
        %p379 = pneg %p86
        %p380 = pneg %p110
        %p381 = pneg %p107
        %p382 = pneg %p131
        %p383 = pneg %p128
        %p384 = pneg %p152
        %p385 = pneg %p149
        %p386 = pneg %p173
        %p387 = pneg %p170
        %p388 = pneg %p194
        %p389 = pneg %p191
        %p390 = pneg %p215
        %p391 = pneg %p212
        %p392 = pneg %p236
        %p393 = pneg %p233
        %p394 = pneg %p257
        %p395 = pneg %p254
        %p396 = pneg %p278
        %p397 = pneg %p275
        %p398 = pneg %p304
        %p399 = pneg %p301
        %s400 = sand.u32 %s291, 1
        %s401 = scalar_lea.sflag [#allocation3], %s400
        %s402 = sand.u32 %s291, 1
        %s403 = smul.addr %s402, 8
        %s404 = scalar_lea.vmem [#allocation2], %s403
        %p405 = scmp.lt.s32.totalorder %s26, 1
        %s406 = scalar_select %p405, %s26, 1
        %s407 = smul.addr %s406, 8
        %s408 = scalar_lea.vmem %s0, %s407
        %v410 = vld [vmem:[%s408] sm:$0xff]
        %v411 = vld [vmem:[%s1] sm:$0x1]
        %v412 = vld [vmem:[%s2] sm:$0x1]
        %vm413 = vcmask 392192
        %v414 = vsel %vm413, %v410, 0.0
        %415 = vadd.xlane.f32.xlu0 %v414
        %v416 = vpop.xlane.xlu0 %415
        %v417 = vrcp.pop 48.0
        %v418 = vmul.f32 48.0, %v417
        %v419 = vsub.f32 1.0, %v418
        %v420 = vmul.f32 %v417, %v419
        %v421 = vadd.f32 %v417, %v420
        %vm422 = vweird.f32 %v417
        %v423 = vsel %vm422, %v417, %v421
        %v424 = vmul.f32 %v416, %v423
        %v425 = vsub.f32 %v410, %v424
        %v426 = vmul.f32 %v425, %v425
        %v427 = vsel %vm413, %v426, 0.0
        %428 = vadd.xlane.f32.xlu0 %v427
        %v429 = vpop.xlane.xlu0 %428
        %v430 = vmul.f32 %v429, %v423
        %v431 = vadd.f32 %v430, 1e-05
        %v432 = vrsqrt.pop %v431
        %v433 = vmul.f32 %v432, %v431
        %v434 = vmul.f32 %v433, %v432
        %v435 = vmul.f32 0.5, %v434
        %v436 = vsub.f32 1.5, %v435
        %v437 = vmul.f32 %v432, %v436
        %vm438 = vweird.f32 %v431
        %vm439 = vweird.f32 %v432
        %vm440 = vmor %vm438, %vm439
        %v441 = vsel %vm440, %v432, %v437
        %v442 = vmul.f32 %v425, %v441
        %v444 = vperm.slane %v411, 0
        %v446 = vmul.f32 %v442, %v444
        %v448 = vperm.slane %v412, 0
        %v450 = vadd.f32 %v446, %v448
        %v451 = vpack.c.bf16 %v450, %v450
        %v452 = vld [vmem:[%s3] sm:$0xf]
        %v453 = vld [vmem:[%s3 + $0x4] sm:$0xf]
        %v454 = vld [vmem:[%s3 + $0x8] sm:$0xf]
        %v455 = vld [vmem:[%s3 + $0xc] sm:$0xf]
        %v456 = vld [vmem:[%s3 + $0x10] sm:$0xf]
        %v457 = vld [vmem:[%s3 + $0x14] sm:$0xf]
        %v458 = vld [vmem:[%s3 + $0x18] sm:$0xf]
        %v459 = vld [vmem:[%s3 + $0x1c] sm:$0xf]
        %v460 = vld [vmem:[%s3 + $0x20] sm:$0xf]
        %v461 = vld [vmem:[%s3 + $0x24] sm:$0xf]
        %v462 = vld [vmem:[%s3 + $0x28] sm:$0xf]
        %v463 = vld [vmem:[%s3 + $0x2c] sm:$0xf]
        %v464 = vld [vmem:[%s3 + $0x30] sm:$0xf]
        %v465 = vld [vmem:[%s3 + $0x34] sm:$0xf]
        %v466 = vld [vmem:[%s3 + $0x38] sm:$0xf]
        %v467 = vld [vmem:[%s3 + $0x3c] sm:$0xf]
        %v468 = vld [vmem:[%s3 + $0x40] sm:$0xf]
        %v469 = vld [vmem:[%s3 + $0x44] sm:$0xf]
        %v470 = vld [vmem:[%s3 + $0x48] sm:$0xf]
        %v471 = vld [vmem:[%s3 + $0x4c] sm:$0xf]
        %v472 = vld [vmem:[%s3 + $0x50] sm:$0xf]
        %v473 = vld [vmem:[%s3 + $0x54] sm:$0xf]
        %v474 = vld [vmem:[%s3 + $0x58] sm:$0xf]
        %v475 = vld [vmem:[%s3 + $0x5c] sm:$0xf]
        %v476 = vld [vmem:[%s3 + $0x60] sm:$0xf]
        %v477 = vld [vmem:[%s3 + $0x64] sm:$0xf]
        %v478 = vld [vmem:[%s3 + $0x68] sm:$0xf]
        %v479 = vld [vmem:[%s3 + $0x6c] sm:$0xf]
        %v480 = vld [vmem:[%s3 + $0x70] sm:$0xf]
        %v481 = vld [vmem:[%s3 + $0x74] sm:$0xf]
        %v482 = vld [vmem:[%s3 + $0x78] sm:$0xf]
        %v483 = vld [vmem:[%s3 + $0x7c] sm:$0xf]
        %v484 = vld [vmem:[%s3 + $0x80] sm:$0xf]
        %v485 = vld [vmem:[%s3 + $0x84] sm:$0xf]
        %v486 = vld [vmem:[%s3 + $0x88] sm:$0xf]
        %v487 = vld [vmem:[%s3 + $0x8c] sm:$0xf]
        %v494 = vunpack.c.l.b16 %v452
        %v495 = vunpack.c.l.b16 %v453
        %v496 = vunpack.c.l.b16 %v454
        %v497 = vunpack.c.l.b16 %v455
        %v498 = vunpack.c.l.b16 %v456
        %v499 = vunpack.c.l.b16 %v457
        %v500 = vpack.c.b16 %v495, %v494
        %v501 = vpack.c.b16 %v497, %v496
        %v502 = vpack.c.b16 %v499, %v498
        %v507 = vsel %vm413, %v451, 0
        %509 = vmatpush.bf16.msra.mxu0 0
        %510 = vmatpush.bf16.msra.mxu0 0
        %511 = vmatpush.bf16.msra.mxu0 0
        %512 = vmatpush.bf16.msra.mxu0 0
        %513 = vmatpush.bf16.msra.mxu0 0
        %514 = vmatpush.bf16.msra.mxu0 %v502
        %515 = vmatpush.bf16.msra.mxu0 %v501
        %516 = vmatpush.bf16.msra.mxu0 %v500
        %517 = vmatmul.bf16.gmra.mxu0 %v507
        %v518 = vpop.f32.mrf.mxu0
        %v519 = vadd.f32 0.0, %v518
        %v520 = vpop.f32.mrf.mxu0
        %521 = vdwg.mxu0
        %v528 = vunpack.c.l.b16 %v458
        %v529 = vunpack.c.l.b16 %v459
        %v530 = vunpack.c.l.b16 %v460
        %v531 = vunpack.c.l.b16 %v461
        %v532 = vunpack.c.l.b16 %v462
        %v533 = vunpack.c.l.b16 %v463
        %v534 = vpack.c.b16 %v529, %v528
        %v535 = vpack.c.b16 %v531, %v530
        %v536 = vpack.c.b16 %v533, %v532
        %540 = vmatpush.bf16.msra.mxu0 0
        %541 = vmatpush.bf16.msra.mxu0 0
        %542 = vmatpush.bf16.msra.mxu0 0
        %543 = vmatpush.bf16.msra.mxu0 0
        %544 = vmatpush.bf16.msra.mxu0 0
        %545 = vmatpush.bf16.msra.mxu0 %v536
        %546 = vmatpush.bf16.msra.mxu0 %v535
        %547 = vmatpush.bf16.msra.mxu0 %v534
        %548 = vmatmul.bf16.gmra.mxu0 %v507
        %v549 = vpop.f32.mrf.mxu0
        %v550 = vadd.f32 0.0, %v549
        %v551 = vpop.f32.mrf.mxu0
        %552 = vdwg.mxu0
        %v559 = vunpack.c.l.b16 %v464
        %v560 = vunpack.c.l.b16 %v465
        %v561 = vunpack.c.l.b16 %v466
        %v562 = vunpack.c.l.b16 %v467
        %v563 = vunpack.c.l.b16 %v468
        %v564 = vunpack.c.l.b16 %v469
        %v565 = vpack.c.b16 %v560, %v559
        %v566 = vpack.c.b16 %v562, %v561
        %v567 = vpack.c.b16 %v564, %v563
        %571 = vmatpush.bf16.msra.mxu0 0
        %572 = vmatpush.bf16.msra.mxu0 0
        %573 = vmatpush.bf16.msra.mxu0 0
        %574 = vmatpush.bf16.msra.mxu0 0
        %575 = vmatpush.bf16.msra.mxu0 0
        %576 = vmatpush.bf16.msra.mxu0 %v567
        %577 = vmatpush.bf16.msra.mxu0 %v566
        %578 = vmatpush.bf16.msra.mxu0 %v565
        %579 = vmatmul.bf16.gmra.mxu0 %v507
        %v580 = vpop.f32.mrf.mxu0
        %v581 = vadd.f32 0.0, %v580
        %v582 = vpop.f32.mrf.mxu0
        %583 = vdwg.mxu0
        %v590 = vunpack.c.l.b16 %v470
        %v591 = vunpack.c.l.b16 %v471
        %v592 = vunpack.c.l.b16 %v472
        %v593 = vunpack.c.l.b16 %v473
        %v594 = vunpack.c.l.b16 %v474
        %v595 = vunpack.c.l.b16 %v475
        %v596 = vpack.c.b16 %v591, %v590
        %v597 = vpack.c.b16 %v593, %v592
        %v598 = vpack.c.b16 %v595, %v594
        %602 = vmatpush.bf16.msra.mxu0 0
        %603 = vmatpush.bf16.msra.mxu0 0
        %604 = vmatpush.bf16.msra.mxu0 0
        %605 = vmatpush.bf16.msra.mxu0 0
        %606 = vmatpush.bf16.msra.mxu0 0
        %607 = vmatpush.bf16.msra.mxu0 %v598
        %608 = vmatpush.bf16.msra.mxu0 %v597
        %609 = vmatpush.bf16.msra.mxu0 %v596
        %610 = vmatmul.bf16.gmra.mxu0 %v507
        %v611 = vpop.f32.mrf.mxu0
        %v612 = vadd.f32 0.0, %v611
        %v613 = vpop.f32.mrf.mxu0
        %614 = vdwg.mxu0
        %v621 = vunpack.c.l.b16 %v476
        %v622 = vunpack.c.l.b16 %v477
        %v623 = vunpack.c.l.b16 %v478
        %v624 = vunpack.c.l.b16 %v479
        %v625 = vunpack.c.l.b16 %v480
        %v626 = vunpack.c.l.b16 %v481
        %v627 = vpack.c.b16 %v622, %v621
        %v628 = vpack.c.b16 %v624, %v623
        %v629 = vpack.c.b16 %v626, %v625
        %633 = vmatpush.bf16.msra.mxu0 0
        %634 = vmatpush.bf16.msra.mxu0 0
        %635 = vmatpush.bf16.msra.mxu0 0
        %636 = vmatpush.bf16.msra.mxu0 0
        %637 = vmatpush.bf16.msra.mxu0 0
        %638 = vmatpush.bf16.msra.mxu0 %v629
        %639 = vmatpush.bf16.msra.mxu0 %v628
        %640 = vmatpush.bf16.msra.mxu0 %v627
        %641 = vmatmul.bf16.gmra.mxu0 %v507
        %v642 = vpop.f32.mrf.mxu0
        %v643 = vadd.f32 0.0, %v642
        %v644 = vpop.f32.mrf.mxu0
        %645 = vdwg.mxu0
        %v652 = vunpack.c.l.b16 %v482
        %v653 = vunpack.c.l.b16 %v483
        %v654 = vunpack.c.l.b16 %v484
        %v655 = vunpack.c.l.b16 %v485
        %v656 = vunpack.c.l.b16 %v486
        %v657 = vunpack.c.l.b16 %v487
        %v658 = vpack.c.b16 %v653, %v652
        %v659 = vpack.c.b16 %v655, %v654
        %v660 = vpack.c.b16 %v657, %v656
        %664 = vmatpush.bf16.msra.mxu0 0
        %665 = vmatpush.bf16.msra.mxu0 0
        %666 = vmatpush.bf16.msra.mxu0 0
        %667 = vmatpush.bf16.msra.mxu0 0
        %668 = vmatpush.bf16.msra.mxu0 0
        %669 = vmatpush.bf16.msra.mxu0 %v660
        %670 = vmatpush.bf16.msra.mxu0 %v659
        %671 = vmatpush.bf16.msra.mxu0 %v658
        %672 = vmatmul.bf16.gmra.mxu0 %v507
        %v673 = vpop.f32.mrf.mxu0
        %v674 = vadd.f32 0.0, %v673
        %v675 = vpop.f32.mrf.mxu0
        %676 = vdwg.mxu0
        %v677 = vlaneseq
        %v678 = vshrl.u32 %v677, 7
        %v679 = vlaneseq
        %v680 = vand.u32 %v679, 127
        %vm681 = vcmp.ge.s32.totalorder %v678, %v680
        %v682 = vsel %vm681, 0.0, -1e+30
        %v683 = vpack.c.bf16 %v519, %v519
        %v684 = vpack.c.bf16 %v550, %v550
        %v685 = vpack.c.bf16 %v581, %v581
        %v686 = vpack.c.bf16 %v612, %v612
        %v687 = vpack.c.bf16 %v643, %v643
        %v688 = vpack.c.bf16 %v674, %v674
        %v690 = vunpack.c.l.b16 %v683
        %v691 = vpack.c.b16 %v690, %v690
        %692 = vrot.lane.b32.xlu0 %v691, 120
        %v693 = vpop.permute.xlu0 %692
        %vm694 = vcmask 64512
        %v696 = vsel %vm694, %v683, 0
        %v699 = vsel %vm694, %v693, 0
        %701 = vmatpush.bf16.xpose.msra.mxu0 0
        %702 = vmatpush.bf16.xpose.msra.mxu0 0
        %703 = vmatpush.bf16.xpose.msra.mxu0 0
        %704 = vmatpush.bf16.xpose.msra.mxu0 0
        %705 = vmatpush.bf16.xpose.msra.mxu0 0
        %706 = vmatpush.bf16.xpose.msra.mxu0 0
        %707 = vmatpush.bf16.xpose.msra.mxu0 0
        %708 = vmatpush.bf16.xpose.msra.mxu0 %v699
        %709 = vmatmul.bf16.gmra.mxu0 %v696
        %v710 = vpop.f32.mrf.mxu0
        %v711 = vadd.f32 0.0, %v710
        %v712 = vpop.f32.mrf.mxu0
        %713 = vdwg.mxu0
        %v715 = vunpack.c.l.b16 %v684
        %v716 = vpack.c.b16 %v715, %v715
        %717 = vrot.lane.b32.xlu0 %v716, 120
        %v718 = vpop.permute.xlu0 %717
        %v720 = vsel %vm694, %v684, 0
        %v723 = vsel %vm694, %v718, 0
        %725 = vmatpush.bf16.xpose.msra.mxu0 0
        %726 = vmatpush.bf16.xpose.msra.mxu0 0
        %727 = vmatpush.bf16.xpose.msra.mxu0 0
        %728 = vmatpush.bf16.xpose.msra.mxu0 0
        %729 = vmatpush.bf16.xpose.msra.mxu0 0
        %730 = vmatpush.bf16.xpose.msra.mxu0 0
        %731 = vmatpush.bf16.xpose.msra.mxu0 0
        %732 = vmatpush.bf16.xpose.msra.mxu0 %v723
        %733 = vmatmul.bf16.gmra.mxu0 %v720
        %v734 = vpop.f32.mrf.mxu0
        %v735 = vadd.f32 0.0, %v734
        %v736 = vpop.f32.mrf.mxu0
        %737 = vdwg.mxu0
        %v739 = vunpack.c.l.b16 %v685
        %v740 = vpack.c.b16 %v739, %v739
        %741 = vrot.lane.b32.xlu0 %v740, 120
        %v742 = vpop.permute.xlu0 %741
        %v744 = vsel %vm694, %v685, 0
        %v747 = vsel %vm694, %v742, 0
        %749 = vmatpush.bf16.xpose.msra.mxu0 0
        %750 = vmatpush.bf16.xpose.msra.mxu0 0
        %751 = vmatpush.bf16.xpose.msra.mxu0 0
        %752 = vmatpush.bf16.xpose.msra.mxu0 0
        %753 = vmatpush.bf16.xpose.msra.mxu0 0
        %754 = vmatpush.bf16.xpose.msra.mxu0 0
        %755 = vmatpush.bf16.xpose.msra.mxu0 0
        %756 = vmatpush.bf16.xpose.msra.mxu0 %v747
        %757 = vmatmul.bf16.gmra.mxu0 %v744
        %v758 = vpop.f32.mrf.mxu0
        %v759 = vadd.f32 0.0, %v758
        %v760 = vpop.f32.mrf.mxu0
        %761 = vdwg.mxu0
        %v763 = vunpack.c.l.b16 %v686
        %v764 = vpack.c.b16 %v763, %v763
        %765 = vrot.lane.b32.xlu0 %v764, 120
        %v766 = vpop.permute.xlu0 %765
        %v768 = vsel %vm694, %v686, 0
        %v771 = vsel %vm694, %v766, 0
        %773 = vmatpush.bf16.xpose.msra.mxu0 0
        %774 = vmatpush.bf16.xpose.msra.mxu0 0
        %775 = vmatpush.bf16.xpose.msra.mxu0 0
        %776 = vmatpush.bf16.xpose.msra.mxu0 0
        %777 = vmatpush.bf16.xpose.msra.mxu0 0
        %778 = vmatpush.bf16.xpose.msra.mxu0 0
        %779 = vmatpush.bf16.xpose.msra.mxu0 0
        %780 = vmatpush.bf16.xpose.msra.mxu0 %v771
        %781 = vmatmul.bf16.gmra.mxu0 %v768
        %v782 = vpop.f32.mrf.mxu0
        %v783 = vadd.f32 0.0, %v782
        %v784 = vpop.f32.mrf.mxu0
        %785 = vdwg.mxu0
        %v787 = vunpack.c.l.b16 %v687
        %v788 = vpack.c.b16 %v787, %v787
        %789 = vrot.lane.b32.xlu0 %v788, 120
        %v790 = vpop.permute.xlu0 %789
        %v792 = vsel %vm694, %v687, 0
        %v795 = vsel %vm694, %v790, 0
        %797 = vmatpush.bf16.xpose.msra.mxu0 0
        %798 = vmatpush.bf16.xpose.msra.mxu0 0
        %799 = vmatpush.bf16.xpose.msra.mxu0 0
        %800 = vmatpush.bf16.xpose.msra.mxu0 0
        %801 = vmatpush.bf16.xpose.msra.mxu0 0
        %802 = vmatpush.bf16.xpose.msra.mxu0 0
        %803 = vmatpush.bf16.xpose.msra.mxu0 0
        %804 = vmatpush.bf16.xpose.msra.mxu0 %v795
        %805 = vmatmul.bf16.gmra.mxu0 %v792
        %v806 = vpop.f32.mrf.mxu0
        %v807 = vadd.f32 0.0, %v806
        %v808 = vpop.f32.mrf.mxu0
        %809 = vdwg.mxu0
        %v811 = vunpack.c.l.b16 %v688
        %v812 = vpack.c.b16 %v811, %v811
        %813 = vrot.lane.b32.xlu0 %v812, 120
        %v814 = vpop.permute.xlu0 %813
        %v816 = vsel %vm694, %v688, 0
        %v819 = vsel %vm694, %v814, 0
        %821 = vmatpush.bf16.xpose.msra.mxu0 0
        %822 = vmatpush.bf16.xpose.msra.mxu0 0
        %823 = vmatpush.bf16.xpose.msra.mxu0 0
        %824 = vmatpush.bf16.xpose.msra.mxu0 0
        %825 = vmatpush.bf16.xpose.msra.mxu0 0
        %826 = vmatpush.bf16.xpose.msra.mxu0 0
        %827 = vmatpush.bf16.xpose.msra.mxu0 0
        %828 = vmatpush.bf16.xpose.msra.mxu0 %v819
        %829 = vmatmul.bf16.gmra.mxu0 %v816
        %v830 = vpop.f32.mrf.mxu0
        %v831 = vadd.f32 0.0, %v830
        %v832 = vpop.f32.mrf.mxu0
        %833 = vdwg.mxu0
        %v834 = vmul.f32 %v711, 0.14433756
        %v835 = vmul.f32 %v735, 0.14433756
        %v836 = vmul.f32 %v759, 0.14433756
        %v837 = vmul.f32 %v783, 0.14433756
        %v838 = vmul.f32 %v807, 0.14433756
        %v839 = vmul.f32 %v831, 0.14433756
        %v840 = vadd.f32 %v834, %v682
        %v841 = vadd.f32 %v835, %v682
        %v842 = vadd.f32 %v836, %v682
        %v843 = vadd.f32 %v837, %v682
        %v844 = vadd.f32 %v838, %v682
        %v845 = vadd.f32 %v839, %v682
        %v846 = vsel %vm694, %v840, -inf
        %847 = vmax.xlane.f32.xlu0 %v846
        %v848 = vpop.xlane.xlu0 %847
        %v849 = vsel %vm694, %v841, -inf
        %850 = vmax.xlane.f32.xlu0 %v849
        %v851 = vpop.xlane.xlu0 %850
        %v852 = vsel %vm694, %v842, -inf
        %853 = vmax.xlane.f32.xlu0 %v852
        %v854 = vpop.xlane.xlu0 %853
        %v855 = vsel %vm694, %v843, -inf
        %856 = vmax.xlane.f32.xlu0 %v855
        %v857 = vpop.xlane.xlu0 %856
        %v858 = vsel %vm694, %v844, -inf
        %859 = vmax.xlane.f32.xlu0 %v858
        %v860 = vpop.xlane.xlu0 %859
        %v861 = vsel %vm694, %v845, -inf
        %862 = vmax.xlane.f32.xlu0 %v861
        %v863 = vpop.xlane.xlu0 %862
        %v864 = vsub.f32 %v840, %v848
        %v865 = vsub.f32 %v841, %v851
        %v866 = vsub.f32 %v842, %v854
        %v867 = vsub.f32 %v843, %v857
        %v868 = vsub.f32 %v844, %v860
        %v869 = vsub.f32 %v845, %v863
        %v870 = vmul.f32 %v864, 1.442695
        %v871 = vpow.pop %v870
        %v872 = vmul.f32 %v865, 1.442695
        %v873 = vpow.pop %v872
        %v874 = vmul.f32 %v866, 1.442695
        %v875 = vpow.pop %v874
        %v876 = vmul.f32 %v867, 1.442695
        %v877 = vpow.pop %v876
        %v878 = vmul.f32 %v868, 1.442695
        %v879 = vpow.pop %v878
        %v880 = vmul.f32 %v869, 1.442695
        %v881 = vpow.pop %v880
        %v882 = vsel %vm694, %v871, 0.0
        %883 = vadd.xlane.f32.xlu0 %v882
        %v884 = vpop.xlane.xlu0 %883
        %v885 = vsel %vm694, %v873, 0.0
        %886 = vadd.xlane.f32.xlu0 %v885
        %v887 = vpop.xlane.xlu0 %886
        %v888 = vsel %vm694, %v875, 0.0
        %889 = vadd.xlane.f32.xlu0 %v888
        %v890 = vpop.xlane.xlu0 %889
        %v891 = vsel %vm694, %v877, 0.0
        %892 = vadd.xlane.f32.xlu0 %v891
        %v893 = vpop.xlane.xlu0 %892
        %v894 = vsel %vm694, %v879, 0.0
        %895 = vadd.xlane.f32.xlu0 %v894
        %v896 = vpop.xlane.xlu0 %895
        %v897 = vsel %vm694, %v881, 0.0
        %898 = vadd.xlane.f32.xlu0 %v897
        %v899 = vpop.xlane.xlu0 %898
        %v900 = vrcp.pop %v884
        %v901 = vrcp.pop %v887
        %v902 = vrcp.pop %v890
        %v903 = vrcp.pop %v893
        %v904 = vrcp.pop %v896
        %v905 = vrcp.pop %v899
        %v906 = vmul.f32 %v871, %v900
        %v907 = vmul.f32 %v873, %v901
        %v908 = vmul.f32 %v875, %v902
        %v909 = vmul.f32 %v877, %v903
        %v910 = vmul.f32 %v879, %v904
        %v911 = vmul.f32 %v881, %v905
        %v912 = vpack.c.bf16 %v906, %v906
        %v913 = vpack.c.bf16 %v907, %v907
        %v914 = vpack.c.bf16 %v908, %v908
        %v915 = vpack.c.bf16 %v909, %v909
        %v916 = vpack.c.bf16 %v910, %v910
        %v917 = vpack.c.bf16 %v911, %v911
        %918 = vrot.lane.b32.xlu0 %v691, 112
        %v919 = vpop.permute.xlu0 %918
        %v921 = vsel %vm694, %v912, 0
        %vm923 = vcmask 1043456
        %v925 = vsel %vm923, %v919, 0
        %927 = vmatpush.bf16.msra.mxu0 0
        %928 = vmatpush.bf16.msra.mxu0 0
        %929 = vmatpush.bf16.msra.mxu0 0
        %930 = vmatpush.bf16.msra.mxu0 0
        %931 = vmatpush.bf16.msra.mxu0 0
        %932 = vmatpush.bf16.msra.mxu0 0
        %933 = vmatpush.bf16.msra.mxu0 0
        %934 = vmatpush.bf16.msra.mxu0 %v925
        %935 = vmatmul.bf16.gmra.mxu0 %v921
        %v936 = vpop.f32.mrf.mxu0
        %v937 = vadd.f32 0.0, %v936
        %v938 = vpop.f32.mrf.mxu0
        %939 = vdwg.mxu0
        %940 = vrot.lane.b32.xlu0 %v716, 112
        %v941 = vpop.permute.xlu0 %940
        %v943 = vsel %vm694, %v913, 0
        %v946 = vsel %vm923, %v941, 0
        %948 = vmatpush.bf16.msra.mxu0 0
        %949 = vmatpush.bf16.msra.mxu0 0
        %950 = vmatpush.bf16.msra.mxu0 0
        %951 = vmatpush.bf16.msra.mxu0 0
        %952 = vmatpush.bf16.msra.mxu0 0
        %953 = vmatpush.bf16.msra.mxu0 0
        %954 = vmatpush.bf16.msra.mxu0 0
        %955 = vmatpush.bf16.msra.mxu0 %v946
        %956 = vmatmul.bf16.gmra.mxu0 %v943
        %v957 = vpop.f32.mrf.mxu0
        %v958 = vadd.f32 0.0, %v957
        %v959 = vpop.f32.mrf.mxu0
        %960 = vdwg.mxu0
        %961 = vrot.lane.b32.xlu0 %v740, 112
        %v962 = vpop.permute.xlu0 %961
        %v964 = vsel %vm694, %v914, 0
        %v967 = vsel %vm923, %v962, 0
        %969 = vmatpush.bf16.msra.mxu0 0
        %970 = vmatpush.bf16.msra.mxu0 0
        %971 = vmatpush.bf16.msra.mxu0 0
        %972 = vmatpush.bf16.msra.mxu0 0
        %973 = vmatpush.bf16.msra.mxu0 0
        %974 = vmatpush.bf16.msra.mxu0 0
        %975 = vmatpush.bf16.msra.mxu0 0
        %976 = vmatpush.bf16.msra.mxu0 %v967
        %977 = vmatmul.bf16.gmra.mxu0 %v964
        %v978 = vpop.f32.mrf.mxu0
        %v979 = vadd.f32 0.0, %v978
        %v980 = vpop.f32.mrf.mxu0
        %981 = vdwg.mxu0
        %982 = vrot.lane.b32.xlu0 %v764, 112
        %v983 = vpop.permute.xlu0 %982
        %v985 = vsel %vm694, %v915, 0
        %v988 = vsel %vm923, %v983, 0
        %990 = vmatpush.bf16.msra.mxu0 0
        %991 = vmatpush.bf16.msra.mxu0 0
        %992 = vmatpush.bf16.msra.mxu0 0
        %993 = vmatpush.bf16.msra.mxu0 0
        %994 = vmatpush.bf16.msra.mxu0 0
        %995 = vmatpush.bf16.msra.mxu0 0
        %996 = vmatpush.bf16.msra.mxu0 0
        %997 = vmatpush.bf16.msra.mxu0 %v988
        %998 = vmatmul.bf16.gmra.mxu0 %v985
        %v999 = vpop.f32.mrf.mxu0
        %v1000 = vadd.f32 0.0, %v999
        %v1001 = vpop.f32.mrf.mxu0
        %1002 = vdwg.mxu0
        %1003 = vrot.lane.b32.xlu0 %v788, 112
        %v1004 = vpop.permute.xlu0 %1003
        %v1006 = vsel %vm694, %v916, 0
        %v1009 = vsel %vm923, %v1004, 0
        %1011 = vmatpush.bf16.msra.mxu0 0
        %1012 = vmatpush.bf16.msra.mxu0 0
        %1013 = vmatpush.bf16.msra.mxu0 0
        %1014 = vmatpush.bf16.msra.mxu0 0
        %1015 = vmatpush.bf16.msra.mxu0 0
        %1016 = vmatpush.bf16.msra.mxu0 0
        %1017 = vmatpush.bf16.msra.mxu0 0
        %1018 = vmatpush.bf16.msra.mxu0 %v1009
        %1019 = vmatmul.bf16.gmra.mxu0 %v1006
        %v1020 = vpop.f32.mrf.mxu0
        %v1021 = vadd.f32 0.0, %v1020
        %v1022 = vpop.f32.mrf.mxu0
        %1023 = vdwg.mxu0
        %1024 = vrot.lane.b32.xlu0 %v812, 112
        %v1025 = vpop.permute.xlu0 %1024
        %v1027 = vsel %vm694, %v917, 0
        %v1030 = vsel %vm923, %v1025, 0
        %1032 = vmatpush.bf16.msra.mxu0 0
        %1033 = vmatpush.bf16.msra.mxu0 0
        %1034 = vmatpush.bf16.msra.mxu0 0
        %1035 = vmatpush.bf16.msra.mxu0 0
        %1036 = vmatpush.bf16.msra.mxu0 0
        %1037 = vmatpush.bf16.msra.mxu0 0
        %1038 = vmatpush.bf16.msra.mxu0 0
        %1039 = vmatpush.bf16.msra.mxu0 %v1030
        %1040 = vmatmul.bf16.gmra.mxu0 %v1027
        %v1041 = vpop.f32.mrf.mxu0
        %v1042 = vadd.f32 0.0, %v1041
        %v1043 = vpop.f32.mrf.mxu0
        %1044 = vdwg.mxu0
        %v1045 = vpack.c.bf16 %v937, %v937
        %v1046 = vpack.c.bf16 %v958, %v958
        %v1047 = vpack.c.bf16 %v979, %v979
        %v1048 = vpack.c.bf16 %v1000, %v1000
        %v1049 = vpack.c.bf16 %v1021, %v1021
        %v1050 = vpack.c.bf16 %v1042, %v1042
        %v1051 = vld [vmem:[%s4] sm:$0xf]
        %v1052 = vld [vmem:[%s4 + $0x4] sm:$0xf]
        %v1053 = vld [vmem:[%s4 + $0x8] sm:$0xf]
        %v1054 = vld [vmem:[%s4 + $0xc] sm:$0xf]
        %v1055 = vld [vmem:[%s4 + $0x10] sm:$0xf]
        %v1056 = vld [vmem:[%s4 + $0x14] sm:$0xf]
        %v1058 = vsel %vm694, %v1045, 0
        %v1061 = vsel %vm923, %v1051, 0
        %1063 = vmatpush.bf16.msra.mxu0 0
        %1064 = vmatpush.bf16.msra.mxu0 0
        %1065 = vmatpush.bf16.msra.mxu0 0
        %1066 = vmatpush.bf16.msra.mxu0 0
        %1067 = vmatpush.bf16.msra.mxu0 0
        %1068 = vmatpush.bf16.msra.mxu0 0
        %1069 = vmatpush.bf16.msra.mxu0 0
        %1070 = vmatpush.bf16.msra.mxu0 %v1061
        %1071 = vmatmul.bf16.gmra.mxu0 %v1058
        %v1072 = vpop.f32.mrf.mxu0
        %v1073 = vadd.f32 0.0, %v1072
        %v1074 = vpop.f32.mrf.mxu0
        %1075 = vdwg.mxu0
        %v1077 = vsel %vm694, %v1046, 0
        %v1080 = vsel %vm923, %v1052, 0
        %1082 = vmatpush.bf16.msra.mxu0 0
        %1083 = vmatpush.bf16.msra.mxu0 0
        %1084 = vmatpush.bf16.msra.mxu0 0
        %1085 = vmatpush.bf16.msra.mxu0 0
        %1086 = vmatpush.bf16.msra.mxu0 0
        %1087 = vmatpush.bf16.msra.mxu0 0
        %1088 = vmatpush.bf16.msra.mxu0 0
        %1089 = vmatpush.bf16.msra.mxu0 %v1080
        %1090 = vmatmul.bf16.gmra.mxu0 %v1077
        %v1091 = vpop.f32.mrf.mxu0
        %v1092 = vadd.f32 0.0, %v1091
        %v1093 = vpop.f32.mrf.mxu0
        %1094 = vdwg.mxu0
        %v1096 = vsel %vm694, %v1047, 0
        %v1099 = vsel %vm923, %v1053, 0
        %1101 = vmatpush.bf16.msra.mxu0 0
        %1102 = vmatpush.bf16.msra.mxu0 0
        %1103 = vmatpush.bf16.msra.mxu0 0
        %1104 = vmatpush.bf16.msra.mxu0 0
        %1105 = vmatpush.bf16.msra.mxu0 0
        %1106 = vmatpush.bf16.msra.mxu0 0
        %1107 = vmatpush.bf16.msra.mxu0 0
        %1108 = vmatpush.bf16.msra.mxu0 %v1099
        %1109 = vmatmul.bf16.gmra.mxu0 %v1096
        %v1110 = vpop.f32.mrf.mxu0
        %v1111 = vadd.f32 0.0, %v1110
        %v1112 = vpop.f32.mrf.mxu0
        %1113 = vdwg.mxu0
        %v1115 = vsel %vm694, %v1048, 0
        %v1118 = vsel %vm923, %v1054, 0
        %1120 = vmatpush.bf16.msra.mxu0 0
        %1121 = vmatpush.bf16.msra.mxu0 0
        %1122 = vmatpush.bf16.msra.mxu0 0
        %1123 = vmatpush.bf16.msra.mxu0 0
        %1124 = vmatpush.bf16.msra.mxu0 0
        %1125 = vmatpush.bf16.msra.mxu0 0
        %1126 = vmatpush.bf16.msra.mxu0 0
        %1127 = vmatpush.bf16.msra.mxu0 %v1118
        %1128 = vmatmul.bf16.gmra.mxu0 %v1115
        %v1129 = vpop.f32.mrf.mxu0
        %v1130 = vadd.f32 0.0, %v1129
        %v1131 = vpop.f32.mrf.mxu0
        %1132 = vdwg.mxu0
        %v1134 = vsel %vm694, %v1049, 0
        %v1137 = vsel %vm923, %v1055, 0
        %1139 = vmatpush.bf16.msra.mxu0 0
        %1140 = vmatpush.bf16.msra.mxu0 0
        %1141 = vmatpush.bf16.msra.mxu0 0
        %1142 = vmatpush.bf16.msra.mxu0 0
        %1143 = vmatpush.bf16.msra.mxu0 0
        %1144 = vmatpush.bf16.msra.mxu0 0
        %1145 = vmatpush.bf16.msra.mxu0 0
        %1146 = vmatpush.bf16.msra.mxu0 %v1137
        %1147 = vmatmul.bf16.gmra.mxu0 %v1134
        %v1148 = vpop.f32.mrf.mxu0
        %v1149 = vadd.f32 0.0, %v1148
        %v1150 = vpop.f32.mrf.mxu0
        %1151 = vdwg.mxu0
        %v1153 = vsel %vm694, %v1050, 0
        %v1156 = vsel %vm923, %v1056, 0
        %1158 = vmatpush.bf16.msra.mxu0 0
        %1159 = vmatpush.bf16.msra.mxu0 0
        %1160 = vmatpush.bf16.msra.mxu0 0
        %1161 = vmatpush.bf16.msra.mxu0 0
        %1162 = vmatpush.bf16.msra.mxu0 0
        %1163 = vmatpush.bf16.msra.mxu0 0
        %1164 = vmatpush.bf16.msra.mxu0 0
        %1165 = vmatpush.bf16.msra.mxu0 %v1156
        %1166 = vmatmul.bf16.gmra.mxu0 %v1153
        %v1167 = vpop.f32.mrf.mxu0
        %v1168 = vadd.f32 0.0, %v1167
        %v1169 = vpop.f32.mrf.mxu0
        %1170 = vdwg.mxu0
        %v1171 = vsel %vm413, %v1073, 0.0
        %v1172 = vsel %vm413, %v1092, 0.0
        %v1173 = vadd.f32 %v1171, %v1172
        %v1174 = vsel %vm413, %v1111, 0.0
        %v1175 = vadd.f32 %v1173, %v1174
        %v1176 = vsel %vm413, %v1130, 0.0
        %v1177 = vadd.f32 %v1175, %v1176
        %v1178 = vsel %vm413, %v1149, 0.0
        %v1179 = vadd.f32 %v1177, %v1178
        %v1180 = vsel %vm413, %v1168, 0.0
        %v1181 = vadd.f32 %v1179, %v1180
        %v1182 = vld [vmem:[%s5] sm:$0x1]
        %v1184 = vperm.slane %v1182, 0
        %v1186 = vadd.f32 %v1181, %v1184
        %v1187 = vadd.f32 %v410, %v1186
        %v1188 = vld [vmem:[%s6] sm:$0x1]
        %v1189 = vld [vmem:[%s7] sm:$0x1]
        %v1190 = vsel %vm413, %v1187, 0.0
        %1191 = vadd.xlane.f32.xlu0 %v1190
        %v1192 = vpop.xlane.xlu0 %1191
        %v1193 = vmul.f32 %v1192, %v423
        %v1194 = vsub.f32 %v1187, %v1193
        %v1195 = vmul.f32 %v1194, %v1194
        %v1196 = vsel %vm413, %v1195, 0.0
        %1197 = vadd.xlane.f32.xlu0 %v1196
        %v1198 = vpop.xlane.xlu0 %1197
        %v1199 = vmul.f32 %v1198, %v423
        %v1200 = vadd.f32 %v1199, 1e-05
        %v1201 = vrsqrt.pop %v1200
        %v1202 = vmul.f32 %v1201, %v1200
        %v1203 = vmul.f32 %v1202, %v1201
        %v1204 = vmul.f32 0.5, %v1203
        %v1205 = vsub.f32 1.5, %v1204
        %v1206 = vmul.f32 %v1201, %v1205
        %vm1207 = vweird.f32 %v1200
        %vm1208 = vweird.f32 %v1201
        %vm1209 = vmor %vm1207, %vm1208
        %v1210 = vsel %vm1209, %v1201, %v1206
        %v1211 = vmul.f32 %v1194, %v1210
        %v1213 = vperm.slane %v1188, 0
        %v1215 = vmul.f32 %v1211, %v1213
        %v1217 = vperm.slane %v1189, 0
        %v1219 = vadd.f32 %v1215, %v1217
        %v1220 = vpack.c.bf16 %v1219, %v1219
        %v1221 = vld [vmem:[%s8] sm:$0xff]
        %v1222 = vld [vmem:[%s8 + $0x8] sm:$0xff]
        %v1223 = vld [vmem:[%s8 + $0x10] sm:$0xff]
        %v1224 = vld [vmem:[%s8 + $0x18] sm:$0xff]
        %v1225 = vld [vmem:[%s8 + $0x20] sm:$0xff]
        %v1226 = vld [vmem:[%s8 + $0x28] sm:$0xff]
        %v1227 = vld [vmem:[%s9] sm:$0x3]
        %v1229 = vperm.slane %v1227, 0
        %v1230 = vperm.slane %v1227, 1
        %v1239 = vunpack.c.l.b16 %v1221
        %v1240 = vunpack.c.h.b16 %v1221
        %v1241 = vunpack.c.l.b16 %v1222
        %v1242 = vunpack.c.h.b16 %v1222
        %v1243 = vunpack.c.l.b16 %v1223
        %v1244 = vunpack.c.h.b16 %v1223
        %v1245 = vunpack.c.l.b16 %v1224
        %v1246 = vunpack.c.h.b16 %v1224
        %v1247 = vunpack.c.l.b16 %v1225
        %v1248 = vunpack.c.h.b16 %v1225
        %v1249 = vunpack.c.l.b16 %v1226
        %v1250 = vunpack.c.h.b16 %v1226
        %v1251 = vpack.c.b16 %v1241, %v1239
        %v1252 = vpack.c.b16 %v1242, %v1240
        %v1253 = vpack.c.b16 %v1245, %v1243
        %v1254 = vpack.c.b16 %v1246, %v1244
        %v1255 = vpack.c.b16 %v1249, %v1247
        %v1256 = vpack.c.b16 %v1250, %v1248
        %v1264 = vsel %vm413, %v1220, 0
        %1266 = vmatpush.bf16.msra.mxu0 0
        %1267 = vmatpush.bf16.msra.mxu0 0
        %1268 = vmatpush.bf16.msra.mxu0 0
        %1269 = vmatpush.bf16.msra.mxu0 0
        %1270 = vmatpush.bf16.msra.mxu0 0
        %1271 = vmatpush.bf16.msra.mxu0 %v1255
        %1272 = vmatpush.bf16.msra.mxu0 %v1253
        %1273 = vmatpush.bf16.msra.mxu0 %v1251
        %1274 = vmatmul.bf16.gmra.mxu0 %v1264
        %v1275 = vpop.f32.mrf.mxu0
        %v1276 = vadd.f32 %v1229, %v1275
        %v1277 = vpop.f32.mrf.mxu0
        %1278 = vdwg.mxu0
        %1279 = vmatpush.bf16.msra.mxu0 0
        %1280 = vmatpush.bf16.msra.mxu0 0
        %1281 = vmatpush.bf16.msra.mxu0 0
        %1282 = vmatpush.bf16.msra.mxu0 0
        %1283 = vmatpush.bf16.msra.mxu0 0
        %1284 = vmatpush.bf16.msra.mxu0 %v1256
        %1285 = vmatpush.bf16.msra.mxu0 %v1254
        %1286 = vmatpush.bf16.msra.mxu0 %v1252
        %1287 = vmatmul.bf16.gmra.mxu0 %v1264
        %v1288 = vpop.f32.mrf.mxu0
        %v1289 = vadd.f32 %v1230, %v1288
        %v1290 = vpop.f32.mrf.mxu0
        %1291 = vdwg.mxu0
        %v1292 = vmax.f32 %v1276, 0.0
        %v1293 = vmax.f32 %v1289, 0.0
        %v1294 = vpack.c.bf16 %v1292, %v1292
        %v1295 = vpack.c.bf16 %v1293, %v1293
        %v1296 = vld [vmem:[%s10] sm:$0xf]
        %v1297 = vld [vmem:[%s10 + $0x4] sm:$0xf]
        %v1298 = vld [vmem:[%s10 + $0x8] sm:$0xf]
        %v1299 = vld [vmem:[%s10 + $0xc] sm:$0xf]
        %v1300 = vld [vmem:[%s10 + $0x10] sm:$0xf]
        %v1301 = vld [vmem:[%s10 + $0x14] sm:$0xf]
        %v1302 = vld [vmem:[%s10 + $0x18] sm:$0xf]
        %v1303 = vld [vmem:[%s10 + $0x1c] sm:$0xf]
        %v1304 = vld [vmem:[%s10 + $0x20] sm:$0xf]
        %v1305 = vld [vmem:[%s10 + $0x24] sm:$0xf]
        %v1306 = vld [vmem:[%s10 + $0x28] sm:$0xf]
        %v1307 = vld [vmem:[%s10 + $0x2c] sm:$0xf]
        %v1308 = vld [vmem:[%s10 + $0x30] sm:$0xf]
        %v1309 = vld [vmem:[%s10 + $0x34] sm:$0xf]
        %v1310 = vld [vmem:[%s10 + $0x38] sm:$0xf]
        %v1311 = vld [vmem:[%s10 + $0x3c] sm:$0xf]
        %v1312 = vld [vmem:[%s10 + $0x40] sm:$0xf]
        %v1313 = vld [vmem:[%s10 + $0x44] sm:$0xf]
        %v1314 = vld [vmem:[%s10 + $0x48] sm:$0xf]
        %v1315 = vld [vmem:[%s10 + $0x4c] sm:$0xf]
        %v1316 = vld [vmem:[%s10 + $0x50] sm:$0xf]
        %v1317 = vld [vmem:[%s10 + $0x54] sm:$0xf]
        %v1318 = vld [vmem:[%s10 + $0x58] sm:$0xf]
        %v1319 = vld [vmem:[%s10 + $0x5c] sm:$0xf]
        %v1320 = vld [vmem:[%s11] sm:$0x1]
        %v1322 = vperm.slane %v1320, 0
        %v1348 = vunpack.c.l.b16 %v1296
        %v1349 = vunpack.c.l.b16 %v1297
        %v1350 = vunpack.c.l.b16 %v1298
        %v1351 = vunpack.c.l.b16 %v1299
        %v1352 = vunpack.c.l.b16 %v1300
        %v1353 = vunpack.c.l.b16 %v1301
        %v1354 = vunpack.c.l.b16 %v1302
        %v1355 = vunpack.c.l.b16 %v1303
        %v1356 = vunpack.c.l.b16 %v1304
        %v1357 = vunpack.c.l.b16 %v1305
        %v1358 = vunpack.c.l.b16 %v1306
        %v1359 = vunpack.c.l.b16 %v1307
        %v1360 = vunpack.c.l.b16 %v1308
        %v1361 = vunpack.c.l.b16 %v1309
        %v1362 = vunpack.c.l.b16 %v1310
        %v1363 = vunpack.c.l.b16 %v1311
        %v1364 = vunpack.c.l.b16 %v1312
        %v1365 = vunpack.c.l.b16 %v1313
        %v1366 = vunpack.c.l.b16 %v1314
        %v1367 = vunpack.c.l.b16 %v1315
        %v1368 = vunpack.c.l.b16 %v1316
        %v1369 = vunpack.c.l.b16 %v1317
        %v1370 = vunpack.c.l.b16 %v1318
        %v1371 = vunpack.c.l.b16 %v1319
        %v1372 = vpack.c.b16 %v1349, %v1348
        %v1373 = vpack.c.b16 %v1351, %v1350
        %v1374 = vpack.c.b16 %v1353, %v1352
        %v1375 = vpack.c.b16 %v1355, %v1354
        %v1376 = vpack.c.b16 %v1357, %v1356
        %v1377 = vpack.c.b16 %v1359, %v1358
        %v1378 = vpack.c.b16 %v1361, %v1360
        %v1379 = vpack.c.b16 %v1363, %v1362
        %v1380 = vpack.c.b16 %v1365, %v1364
        %v1381 = vpack.c.b16 %v1367, %v1366
        %v1382 = vpack.c.b16 %v1369, %v1368
        %v1383 = vpack.c.b16 %v1371, %v1370
        %vm1396 = vcmask 523264
        %v1398 = vsel %vm1396, %v1295, 0
        %1400 = vmatpush.bf16.msra.mxu0 %v1379
        %1401 = vmatpush.bf16.msra.mxu0 %v1378
        %1402 = vmatpush.bf16.msra.mxu0 %v1377
        %1403 = vmatpush.bf16.msra.mxu0 %v1376
        %1404 = vmatpush.bf16.msra.mxu0 %v1375
        %1405 = vmatpush.bf16.msra.mxu0 %v1374
        %1406 = vmatpush.bf16.msra.mxu0 %v1373
        %1407 = vmatpush.bf16.msra.mxu0 %v1372
        %1408 = vmatmul.bf16.gmra.mxu0 %v1294
        %v1409 = vpop.f32.mrf.mxu0
        %v1410 = vadd.f32 %v1322, %v1409
        %v1411 = vpop.f32.mrf.mxu0
        %1412 = vdwg.mxu0
        %1413 = vmatpush.bf16.msra.mxu0 0
        %1414 = vmatpush.bf16.msra.mxu0 0
        %1415 = vmatpush.bf16.msra.mxu0 0
        %1416 = vmatpush.bf16.msra.mxu0 0
        %1417 = vmatpush.bf16.msra.mxu0 %v1383
        %1418 = vmatpush.bf16.msra.mxu0 %v1382
        %1419 = vmatpush.bf16.msra.mxu0 %v1381
        %1420 = vmatpush.bf16.msra.mxu0 %v1380
        %1421 = vmatmul.bf16.gmra.mxu0 %v1398
        %v1422 = vpop.f32.mrf.mxu0
        %v1423 = vadd.f32 %v1410, %v1422
        %v1424 = vpop.f32.mrf.mxu0
        %1425 = vdwg.mxu0
        %v1426 = vadd.f32 %v1187, %v1423
        %1427 = vst.msk [vmem:[%s404] sm:$0xff] %vm413, %v1426
        %s1428 = sand.u32 %s291, 1
        %s1429 = scalar_lea.sflag [#allocation3], %s1428
        %s1430 = sand.u32 %s291, 1
        %s1431 = smul.addr %s1430, 8
        %s1432 = scalar_lea.vmem [#allocation2], %s1431
        // Predicated region
        $region69: #{tpu_custom_call.1} parent=67 // pred_check
          %p1433 = pneg %p301
        $region70: #{tpu_custom_call.1} parent=67 // pred_check_branch
          %1435 = sbr.rel (%p1433) target = $region72
        $region71: #{tpu_custom_call.1} parent=67 // pred_region
          %1437 = vsyncadd %s1429, 0
          %s1438 = smul.addr %s26, 8
          %s1439 = scalar_lea.hbm %s12, %s1438
          %s1441 = sshll.u32 %s1432, 4
          %s1442 = int_to_ptr.vmem [resolvable:$true] %s1441
          %s1443 = sshll.u32 %s1439, 4
          %s1444 = int_to_ptr.hbm [resolvable:$true] %s1443
          %1446 = dma.vmem_to_hbm [thread:$0]  %s1442, 128, %s1444, %s1429
        $region72: #{tpu_custom_call.1} parent=67 // pred_fallthru
          _
      $region68: #{tpu_custom_call.1} parent=5 // pred_fallthru
        _
      %p1447 = scmp.le.s32.totalorder 2, %s21
      // Predicated region
      $region73: #{tpu_custom_call.1} parent=5 // pred_check
        %p1448 = pneg %p1447
      $region74: #{tpu_custom_call.1} parent=5 // pred_check_branch
        %1450 = sbr.rel (%p1448) target = $region76
      $region75: #{tpu_custom_call.1} parent=5 // pred_region
        %s1451 = ssub.s32 %s21, 2
        // Predicated region
        $region77: #{tpu_custom_call.1} parent=75 // pred_check
          %p1452 = pneg %p307
        $region78: #{tpu_custom_call.1} parent=75 // pred_check_branch
          %1454 = sbr.rel (%p1452) target = $region80
        $region79: #{tpu_custom_call.1} parent=75 // pred_region
          %s1455 = sand.u32 %s292, 1
          %s1456 = scalar_lea.sflag [#allocation3], %s1455
          %s1457 = sand.u32 %s292, 1
          %s1458 = smul.addr %s1457, 8
          %s1459 = scalar_lea.vmem [#allocation2], %s1458
          %1461 = dma.done %s1456, 128
        $region80: #{tpu_custom_call.1} parent=75 // pred_fallthru
          _
      $region76: #{tpu_custom_call.1} parent=5 // pred_fallthru
        _
    $region6: #{tpu_custom_call.1} parent=1 // loop_footer
      %s25 = sadd.s32 1, %s21
    $region7: #{tpu_custom_call.1} parent=1 // loop_footer_branch
      %20 = sbr.rel target = $region3
    $region8: #{tpu_custom_call.1} parent=1 // loop_exit
      _
    %1462 = vsyncpa [#allocation3], 1
    %s1463 = scalar_lea.sflag [#allocation3], 1
    %1464 = vsyncpa %s1463, 1

</llo_original>
